<compile_context>
chip_gen: v7x
topology: tpu7x:2x2x1
jax: 0.10.0
libtpu: 0.0.40
codegen_flags: <defaults>
</compile_context>

<pallas_src>
import functools

import jax
import jax.numpy as jnp
from jax import lax
from jax.experimental import pallas as pl
from jax.experimental.pallas import tpu as pltpu


def _round_up(x, m):
    return (x + m - 1) // m * m


def _forward_kernel(frames_ref, w_ref, b_ref, labels_ref,
                    frame_ref, clip_ref, loss_ref,
                    sum_acc, max_acc,
                    *, coef, t_real, inv_t, tile_t, n_valid, mask_tail):
    """Streaming linear frame head + fused long/short BCE-with-logits loss.

    Grid = (num_b, num_t): batch tiles (parallel) x frame tiles (arbitrary
    reduction axis, accumulated in VMEM scratch, finalized on the last step).
    """
    ti = pl.program_id(1)

    @pl.when(ti == 0)
    def _init():
        sum_acc[...] = jnp.zeros_like(sum_acc)
        max_acc[...] = jnp.full_like(max_acc, -jnp.inf)

    tb, tt, d = frames_ref.shape
    c = w_ref.shape[1]

    # Fused pad-free load + bf16 cast: frames come straight from HBM as f32.
    x2 = frames_ref[...].reshape(tb * tt, d).astype(jnp.bfloat16)
    w = w_ref[...].astype(jnp.bfloat16)
    logits2 = jnp.dot(x2, w, preferred_element_type=jnp.float32)   # f32 accumulation
    logits2 = logits2 + b_ref[...]                                  # bias [1, c]
    logits = logits2.reshape(tb, tt, c)                             # [tb, tt, c] f32

    # Stream framewise logits straight back to HBM (bf16 halves the dominant write
    # stream); out-of-bounds rows of a ragged last T-tile are dropped by Pallas.
    frame_ref[...] = logits.astype(frame_ref.dtype)

    if mask_tail:
        # Last T-tile may read past T (unspecified padding): exclude those rows.
        fidx = ti * tile_t + lax.broadcasted_iota(jnp.int32, (tt, c), 0)
        valid = fidx < t_real
        sum_in = jnp.where(valid, logits, 0.0)
        max_in = jnp.where(valid, logits, -jnp.inf)
    else:
        sum_in = logits
        max_in = logits

    # Fused running reductions over the frame axis (VPU work under MXU/DMA slack).
    sum_acc[...] = sum_acc[...] + jnp.sum(sum_in, axis=1)
    max_acc[...] = jnp.maximum(max_acc[...], jnp.max(max_in, axis=1))

    @pl.when(ti == pl.num_programs(1) - 1)
    def _finalize():
        clipwise = sum_acc[...] * inv_t                             # temporal mean
        frame_max = max_acc[...]
        y = labels_ref[0]                                           # [tb, c]

        # BCEWithLogitsLoss elementwise: max(x,0) - x*y + log1p(exp(-|x|))
        def bce_sum(x):
            return jnp.sum(jnp.maximum(x, 0.0) - x * y
                           + jnp.log1p(jnp.exp(-jnp.abs(x))))

        part = (bce_sum(clipwise) * (1.0 - coef)
                + bce_sum(frame_max) * coef) / n_valid              # partial of global mean

        clip_ref[0] = clipwise.astype(clip_ref.dtype)
        loss_ref[...] = jnp.broadcast_to(part, loss_ref.shape).astype(loss_ref.dtype)


def multilabel_cls_forward_long_short(frames, labels, w, b,
                                      framewise_pred_coef=0.5,
                                      tile_t=None, tile_b=None,
                                      framewise_dtype=jnp.bfloat16):
    """Mirrors MultilabelClsForwardLongShort.forward (training path,
    loss_type='baseline_and_max_frame', default mean reductions)."""
    B, T, D = frames.shape
    Dw, C = w.shape
    assert Dw == D and labels.shape == (B, C)
    b2 = jnp.reshape(b, (1, C)).astype(jnp.float32)

    # ---- batch tiling: parallel grid axis (lets v7x use both TensorCores) ----
    if tile_b is None:
        tile_b = B // 2 if (B >= 2 and B % 2 == 0) else B
    assert B % tile_b == 0
    num_b = B // tile_b
    labels_r = labels.astype(jnp.float32).reshape(num_b, tile_b, C)   # tiny reshape

    # ---- per-generation VMEM budget -> frame tile size ----
    try:
        vmem_cap = int(pltpu.get_tpu_info().vmem_capacity_bytes)
    except Exception:
        vmem_cap = 64 << 20                        # conservative (v7x-sized) fallback
    usable = min((vmem_cap * 3) // 4, 100 << 20)   # ~48 MiB on v7x, ~96 MiB on v5e/v6e

    out_bytes = jnp.dtype(framewise_dtype).itemsize
    fixed = 2 * (D * C * 4 + C * 4 + tile_b * C * 4)       # resident W / bias / labels
    fixed += 2 * (tile_b * C * 4 + 8 * 128 * 4)            # clipwise / loss out blocks
    fixed += 2 * tile_b * C * 4                             # sum / max scratch
    fixed += 2 << 20                                        # compiler scratch headroom
    per_tt = 2 * tile_b * (D * 4 + C * out_bytes)           # double-buffered streams / frame

    if tile_t is None:
        avail = max(usable - fixed, per_tt * 16)
        tt = int(avail // per_tt)
        tt = max(16, min(tt, 4096))
        tile_t = (tt // 16) * 16                            # bf16 sublane-pack friendly
    tile_t = int(tile_t)
    if tile_t < T and tile_t % 8 != 0:
        tile_t = _round_up(tile_t, 8)
    if tile_t >= T:
        tile_t = T                                          # full extent is always legal
    num_t = -(-T // tile_t)                                 # ceil-div grid; ragged tail ok
    mask_tail = (T % tile_t) != 0

    needed = fixed + per_tt * tile_t
    vmem_limit = int(min(max(needed + (4 << 20), 32 << 20), (vmem_cap * 9) // 10))

    kernel = functools.partial(
        _forward_kernel,
        coef=float(framewise_pred_coef),
        t_real=T,
        inv_t=1.0 / float(T),
        tile_t=tile_t,
        n_valid=float(B * C),
        mask_tail=mask_tail)

    cost = pl.CostEstimate(
        flops=2 * B * num_t * tile_t * D * C,
        transcendentals=4 * B * C,
        bytes_accessed=(B * T * D * 4 + D * C * 4 + C * 4 + B * C * 4
                        + B * T * C * out_bytes + B * C * 4 + num_b * 8 * 128 * 4))

    def build(single_buffer_residents):
        # W and bias never change across the grid: single-buffer them to save VMEM.
        if single_buffer_residents:
            w_spec = pl.BlockSpec((D, C), lambda bi, ti: (0, 0),
                                  pipeline_mode=pl.Buffered(1))
            b_spec = pl.BlockSpec((1, C), lambda bi, ti: (0, 0),
                                  pipeline_mode=pl.Buffered(1))
        else:
            w_spec = pl.BlockSpec((D, C), lambda bi, ti: (0, 0))
            b_spec = pl.BlockSpec((1, C), lambda bi, ti: (0, 0))
        return pl.pallas_call(
            kernel,
            grid=(num_b, num_t),
            in_specs=[
                pl.BlockSpec((tile_b, tile_t, D), lambda bi, ti: (bi, ti, 0)),  # frames
                w_spec,                                                          # W
                b_spec,                                                          # bias
                pl.BlockSpec((1, tile_b, C), lambda bi, ti: (bi, 0, 0)),         # labels
            ],
            out_specs=(
                pl.BlockSpec((tile_b, tile_t, C), lambda bi, ti: (bi, ti, 0)),   # framewise
                pl.BlockSpec((1, tile_b, C), lambda bi, ti: (bi, 0, 0)),         # clipwise
                pl.BlockSpec((1, 8, 128), lambda bi, ti: (bi, 0, 0)),            # loss parts
            ),
            out_shape=(
                jax.ShapeDtypeStruct((B, T, C), framewise_dtype),
                jax.ShapeDtypeStruct((num_b, tile_b, C), jnp.float32),
                jax.ShapeDtypeStruct((num_b, 8, 128), jnp.float32),
            ),
            scratch_shapes=[
                pltpu.VMEM((tile_b, C), jnp.float32),   # running sum over frames
                pltpu.VMEM((tile_b, C), jnp.float32),   # running max over frames
            ],
            compiler_params=pltpu.CompilerParams(
                dimension_semantics=("parallel", "arbitrary"),
                vmem_limit_bytes=vmem_limit),
            cost_estimate=cost,
        )

    try:
        framewise, clip_r, loss_parts = build(True)(frames, w, b2, labels_r)
    except Exception:
        # Fallback if this JAX build rejects pipeline_mode=pl.Buffered(1).
        framewise, clip_r, loss_parts = build(False)(frames, w, b2, labels_r)

    clipwise = clip_r.reshape(B, C)
    loss = loss_parts[:, 0, 0].sum()           # combine per-batch-tile partial losses

    losses = {"loss": loss}
    inputs = {"target": labels}
    output = {"clipwise_logits_long": clipwise, "framewise_logits_long": framewise}
    return losses, inputs, output


def _reference(frames, labels, w, b, coef=0.5):
    """Pure-JAX reference using the same bf16-quantized matmul operands."""
    f = frames.astype(jnp.bfloat16).astype(jnp.float32)
    wq = w.astype(jnp.bfloat16).astype(jnp.float32)
    framewise = jnp.einsum("btd,dc->btc", f, wq,
                           preferred_element_type=jnp.float32) + b.reshape(1, 1, -1)
    clipwise = jnp.mean(framewise, axis=1)
    frame_max = jnp.max(framewise, axis=1)

    def bce_mean(x, y):
        return jnp.mean(jnp.maximum(x, 0.0) - x * y + jnp.log1p(jnp.exp(-jnp.abs(x))))

    loss = (bce_mean(clipwise, labels) * (1.0 - coef)
            + bce_mean(frame_max, labels) * coef)
    return loss, clipwise, framewise


if __name__ == "__main__":
    key = jax.random.PRNGKey(0)
    k_frames, k_labels, k_w, k_b = jax.random.split(key, 4)

    # batch=2, frames=40 (ragged: 2 full 16-frame tiles + 8-frame tail), feat=32, classes=24
    B, T, D, C = 2, 40, 32, 24

    frames = jax.random.normal(k_frames, (B, T, D), dtype=jnp.float32)
    labels = jax.random.bernoulli(k_labels, p=0.2, shape=(B, C)).astype(jnp.float32)
    w = 0.1 * jax.random.normal(k_w, (D, C), dtype=jnp.float32)
    b = 0.01 * jax.random.normal(k_b, (1, C), dtype=jnp.float32)

    losses, inputs, output = multilabel_cls_forward_long_short(
        frames, labels, w, b, framewise_pred_coef=0.5, tile_t=16)  # 3 T-steps, ragged tail
    loss = jax.block_until_ready(losses["loss"])

    ref_loss, ref_clip, ref_framewise = _reference(frames, labels, w, b, 0.5)

    assert output["framewise_logits_long"].shape == (B, T, C)
    assert output["framewise_logits_long"].dtype == jnp.bfloat16
    assert output["clipwise_logits_long"].shape == (B, C)
    assert inputs["target"].shape == (B, C)
    assert jnp.allclose(loss, ref_loss, atol=1e-4, rtol=1e-4), (loss, ref_loss)
    assert jnp.allclose(output["clipwise_logits_long"], ref_clip,
                        atol=2e-4, rtol=1e-3)
    assert jnp.allclose(output["framewise_logits_long"].astype(jnp.float32),
                        ref_framewise, atol=3e-2, rtol=3e-2)

    print("KERNEL_OK")
</pallas_src>

<mosaic_0001>
module attributes {stable_mosaic.version = 11 : i64} {
  func.func @_forward_kernel(%arg0: i32, %arg1: i32, %arg2: memref<1x16x32xf32, #tpu.memory_space<vmem>>, %arg3: memref<32x24xf32, #tpu.memory_space<vmem>>, %arg4: memref<1x24xf32, #tpu.memory_space<vmem>>, %arg5: memref<1x1x24xf32, #tpu.memory_space<vmem>>, %arg6: memref<1x16x24xbf16, #tpu.memory_space<vmem>>, %arg7: memref<1x1x24xf32, #tpu.memory_space<vmem>>, %arg8: memref<1x8x128xf32, #tpu.memory_space<vmem>>, %arg9: memref<1x24xf32, #tpu.memory_space<vmem>>, %arg10: memref<1x24xf32, #tpu.memory_space<vmem>>) attributes {dimension_semantics = [#tpu.dimension_semantics<parallel>, #tpu.dimension_semantics<arbitrary>], iteration_bounds = array<i64: 2, 3>, scalar_prefetch = 0 : i64, scratch_operands = 2 : i64, tpu.core_type = #tpu.core_type<tc>, window_params = [{transform_indices = @transform_0, window_bounds = array<i64: 1, 16, 32>}, {pipeline_mode = #tpu.pipeline_mode<synchronous>, transform_indices = @transform_1, window_bounds = array<i64: 32, 24>}, {pipeline_mode = #tpu.pipeline_mode<synchronous>, transform_indices = @transform_2, window_bounds = array<i64: 1, 24>}, {transform_indices = @transform_3, window_bounds = array<i64: 1, 1, 24>}, {transform_indices = @transform_4, window_bounds = array<i64: 1, 16, 24>}, {transform_indices = @transform_5, window_bounds = array<i64: 1, 1, 24>}, {transform_indices = @transform_6, window_bounds = array<i64: 1, 8, 128>}]} {
    %c0_i32 = arith.constant 0 : i32
    %0 = arith.cmpi eq, %arg1, %c0_i32 : i32
    %1 = arith.extui %0 : i1 to i32
    %c0_i32_0 = arith.constant 0 : i32
    %2 = arith.cmpi ne, %1, %c0_i32_0 : i32
    scf.if %2 {
      %cst_23 = arith.constant 0.000000e+00 : f32
      %38 = vector.broadcast %cst_23 : f32 to vector<1x24xf32>
      %c0_24 = arith.constant 0 : index
      %c0_25 = arith.constant 0 : index
      %39 = vector.load %arg9[%c0_24, %c0_25] : memref<1x24xf32, #tpu.memory_space<vmem>>, vector<1x24xf32>
      tpu.vector_store %arg9[%c0_24, %c0_25], %38 {strides = array<i32>} : memref<1x24xf32, #tpu.memory_space<vmem>>, vector<1x24xf32>,
      %cst_26 = arith.constant 0xFF800000 : f32
      %40 = vector.broadcast %cst_26 : f32 to vector<1x24xf32>
      %c0_27 = arith.constant 0 : index
      %c0_28 = arith.constant 0 : index
      %41 = vector.load %arg10[%c0_27, %c0_28] : memref<1x24xf32, #tpu.memory_space<vmem>>, vector<1x24xf32>
      tpu.vector_store %arg10[%c0_27, %c0_28], %40 {strides = array<i32>} : memref<1x24xf32, #tpu.memory_space<vmem>>, vector<1x24xf32>,
    } else {
    }
    %c0 = arith.constant 0 : index
    %c0_1 = arith.constant 0 : index
    %c0_2 = arith.constant 0 : index
    %3 = vector.load %arg2[%c0, %c0_1, %c0_2] : memref<1x16x32xf32, #tpu.memory_space<vmem>>, vector<1x16x32xf32>
    %4 = vector.shape_cast %3 : vector<1x16x32xf32> to vector<16x32xf32>
    %5 = arith.truncf %4 : vector<16x32xf32> to vector<16x32xbf16>
    %c0_3 = arith.constant 0 : index
    %c0_4 = arith.constant 0 : index
    %6 = vector.load %arg3[%c0_3, %c0_4] : memref<32x24xf32, #tpu.memory_space<vmem>>, vector<32x24xf32>
    %7 = arith.truncf %6 : vector<32x24xf32> to vector<32x24xbf16>
    %cst = arith.constant dense<0.000000e+00> : vector<16x24xf32>
    %8 = tpu.matmul %5, %7, %cst {dimension_numbers = #tpu.dot_dimension_numbers<[1], [0], [0], [1], [0, 0, 1, 1], [], []>} : vector<16x32xbf16>, vector<32x24xbf16>, vector<16x24xf32> -> vector<16x24xf32>
    %c0_5 = arith.constant 0 : index
    %c0_6 = arith.constant 0 : index
    %9 = vector.load %arg4[%c0_5, %c0_6] : memref<1x24xf32, #tpu.memory_space<vmem>>, vector<1x24xf32>
    %10 = vector.broadcast %9 : vector<1x24xf32> to vector<16x24xf32>
    %11 = arith.addf %8, %10 : vector<16x24xf32>
    %12 = vector.shape_cast %11 : vector<16x24xf32> to vector<1x16x24xf32>
    %13 = arith.truncf %12 : vector<1x16x24xf32> to vector<1x16x24xbf16>
    %c0_7 = arith.constant 0 : index
    %c0_8 = arith.constant 0 : index
    %c0_9 = arith.constant 0 : index
    %14 = vector.load %arg6[%c0_7, %c0_8, %c0_9] : memref<1x16x24xbf16, #tpu.memory_space<vmem>>, vector<1x16x24xbf16>
    tpu.vector_store %arg6[%c0_7, %c0_8, %c0_9], %13 {strides = array<i32>} : memref<1x16x24xbf16, #tpu.memory_space<vmem>>, vector<1x16x24xbf16>,
    %c16_i32 = arith.constant 16 : i32
    %15 = arith.muli %arg1, %c16_i32 : i32
    %16 = tpu.iota {dimensions = array<i32: 0>} : vector<16x24xi32>
    %17 = vector.broadcast %15 : i32 to vector<16x24xi32>
    %18 = arith.addi %17, %16 : vector<16x24xi32>
    %c40_i32 = arith.constant 40 : i32
    %19 = vector.broadcast %c40_i32 : i32 to vector<16x24xi32>
    %20 = arith.cmpi slt, %18, %19 : vector<16x24xi32>
    %cst_10 = arith.constant 0.000000e+00 : f32
    %21 = vector.shape_cast %20 : vector<16x24xi1> to vector<1x16x24xi1>
    %22 = vector.broadcast %cst_10 : f32 to vector<1x16x24xf32>
    %23 = arith.select %21, %12, %22 : vector<1x16x24xi1>, vector<1x16x24xf32>
    %cst_11 = arith.constant 0xFF800000 : f32
    %24 = vector.shape_cast %20 : vector<16x24xi1> to vector<1x16x24xi1>
    %25 = vector.broadcast %cst_11 : f32 to vector<1x16x24xf32>
    %26 = arith.select %24, %12, %25 : vector<1x16x24xi1>, vector<1x16x24xf32>
    %c0_12 = arith.constant 0 : index
    %c0_13 = arith.constant 0 : index
    %27 = vector.load %arg9[%c0_12, %c0_13] : memref<1x24xf32, #tpu.memory_space<vmem>>, vector<1x24xf32>
    %cst_14 = arith.constant dense<0.000000e+00> : vector<1x24xf32>
    %28 = vector.multi_reduction <add>, %23, %cst_14 [1] : vector<1x16x24xf32> to vector<1x24xf32>
    %29 = arith.addf %27, %28 : vector<1x24xf32>
    %c0_15 = arith.constant 0 : index
    %c0_16 = arith.constant 0 : index
    %30 = vector.load %arg9[%c0_15, %c0_16] : memref<1x24xf32, #tpu.memory_space<vmem>>, vector<1x24xf32>
    tpu.vector_store %arg9[%c0_15, %c0_16], %29 {strides = array<i32>} : memref<1x24xf32, #tpu.memory_space<vmem>>, vector<1x24xf32>,
    %c0_17 = arith.constant 0 : index
    %c0_18 = arith.constant 0 : index
    %31 = vector.load %arg10[%c0_17, %c0_18] : memref<1x24xf32, #tpu.memory_space<vmem>>, vector<1x24xf32>
    %cst_19 = arith.constant dense<0xFF800000> : vector<1x24xf32>
    %32 = vector.multi_reduction <maximumf>, %26, %cst_19 [1] : vector<1x16x24xf32> to vector<1x24xf32>
    %33 = arith.maximumf %31, %32 : vector<1x24xf32>
    %c0_20 = arith.constant 0 : index
    %c0_21 = arith.constant 0 : index
    %34 = vector.load %arg10[%c0_20, %c0_21] : memref<1x24xf32, #tpu.memory_space<vmem>>, vector<1x24xf32>
    tpu.vector_store %arg10[%c0_20, %c0_21], %33 {strides = array<i32>} : memref<1x24xf32, #tpu.memory_space<vmem>>, vector<1x24xf32>,
    %c2_i32 = arith.constant 2 : i32
    %35 = arith.cmpi eq, %arg1, %c2_i32 : i32
    %36 = arith.extui %35 : i1 to i32
    %c0_i32_22 = arith.constant 0 : i32
    %37 = arith.cmpi ne, %36, %c0_i32_22 : i32
    scf.if %37 {
      %c0_23 = arith.constant 0 : index
      %c0_24 = arith.constant 0 : index
      %38 = vector.load %arg9[%c0_23, %c0_24] : memref<1x24xf32, #tpu.memory_space<vmem>>, vector<1x24xf32>
      %cst_25 = arith.constant 2.500000e-02 : f32
      %39 = vector.broadcast %cst_25 : f32 to vector<1x24xf32>
      %40 = arith.mulf %38, %39 : vector<1x24xf32>
      %c0_26 = arith.constant 0 : index
      %c0_27 = arith.constant 0 : index
      %41 = vector.load %arg10[%c0_26, %c0_27] : memref<1x24xf32, #tpu.memory_space<vmem>>, vector<1x24xf32>
      %c0_28 = arith.constant 0 : index
      %c0_29 = arith.constant 0 : index
      %c0_30 = arith.constant 0 : index
      %42 = vector.load %arg5[%c0_28, %c0_29, %c0_30] : memref<1x1x24xf32, #tpu.memory_space<vmem>>, vector<1x1x24xf32>
      %43 = vector.shape_cast %42 : vector<1x1x24xf32> to vector<1x24xf32>
      %cst_31 = arith.constant 0.000000e+00 : f32
      %44 = vector.broadcast %cst_31 : f32 to vector<1x24xf32>
      %45 = arith.maximumf %40, %44 : vector<1x24xf32>
      %46 = arith.mulf %40, %43 : vector<1x24xf32>
      %47 = arith.subf %45, %46 : vector<1x24xf32>
      %48 = math.absf %40 : vector<1x24xf32>
      %cst_32 = arith.constant 0.000000e+00 : f32
      %49 = vector.broadcast %cst_32 : f32 to vector<1x24xf32>
      %50 = arith.subf %49, %48 : vector<1x24xf32>
      %51 = math.exp %50 : vector<1x24xf32>
      %52 = math.log1p %51 : vector<1x24xf32>
      %53 = arith.addf %47, %52 : vector<1x24xf32>
      %54 = vector.shape_cast %53 : vector<1x24xf32> to vector<1x1x24xf32>
      %cst_33 = arith.constant dense<0.000000e+00> : vector<1xf32>
      %55 = vector.multi_reduction <add>, %54, %cst_33 [1, 2] : vector<1x1x24xf32> to vector<1xf32>
      %56 = vector.shape_cast %55 : vector<1xf32> to vector<1x1x1xf32>
      %57 = vector.extract %56[0, 0, 0] : f32 from vector<1x1x1xf32>
      %cst_34 = arith.constant 5.000000e-01 : f32
      %58 = arith.mulf %57, %cst_34 : f32
      %cst_35 = arith.constant 0.000000e+00 : f32
      %59 = vector.broadcast %cst_35 : f32 to vector<1x24xf32>
      %60 = arith.maximumf %41, %59 : vector<1x24xf32>
      %61 = arith.mulf %41, %43 : vector<1x24xf32>
      %62 = arith.subf %60, %61 : vector<1x24xf32>
      %63 = math.absf %41 : vector<1x24xf32>
      %cst_36 = arith.constant 0.000000e+00 : f32
      %64 = vector.broadcast %cst_36 : f32 to vector<1x24xf32>
      %65 = arith.subf %64, %63 : vector<1x24xf32>
      %66 = math.exp %65 : vector<1x24xf32>
      %67 = math.log1p %66 : vector<1x24xf32>
      %68 = arith.addf %62, %67 : vector<1x24xf32>
      %69 = vector.shape_cast %68 : vector<1x24xf32> to vector<1x1x24xf32>
      %cst_37 = arith.constant dense<0.000000e+00> : vector<1xf32>
      %70 = vector.multi_reduction <add>, %69, %cst_37 [1, 2] : vector<1x1x24xf32> to vector<1xf32>
      %71 = vector.shape_cast %70 : vector<1xf32> to vector<1x1x1xf32>
      %72 = vector.extract %71[0, 0, 0] : f32 from vector<1x1x1xf32>
      %cst_38 = arith.constant 5.000000e-01 : f32
      %73 = arith.mulf %72, %cst_38 : f32
      %74 = arith.addf %58, %73 : f32
      %cst_39 = arith.constant 4.800000e+01 : f32
      %75 = arith.divf %74, %cst_39 : f32
      %c0_40 = arith.constant 0 : index
      %c0_41 = arith.constant 0 : index
      %c0_42 = arith.constant 0 : index
      %76 = vector.load %arg7[%c0_40, %c0_41, %c0_42] : memref<1x1x24xf32, #tpu.memory_space<vmem>>, vector<1x1x24xf32>
      %77 = vector.shape_cast %76 : vector<1x1x24xf32> to vector<1x24xf32>
      %78 = vector.shape_cast %40 : vector<1x24xf32> to vector<1x1x24xf32>
      tpu.vector_store %arg7[%c0_40, %c0_41, %c0_42], %78 {strides = array<i32>} : memref<1x1x24xf32, #tpu.memory_space<vmem>>, vector<1x1x24xf32>,
      %79 = vector.broadcast %75 : f32 to vector<1x8x128xf32>
      %c0_43 = arith.constant 0 : index
      %c0_44 = arith.constant 0 : index
      %c0_45 = arith.constant 0 : index
      %80 = vector.load %arg8[%c0_43, %c0_44, %c0_45] : memref<1x8x128xf32, #tpu.memory_space<vmem>>, vector<1x8x128xf32>
      tpu.vector_store %arg8[%c0_43, %c0_44, %c0_45], %79 {strides = array<i32>} : memref<1x8x128xf32, #tpu.memory_space<vmem>>, vector<1x8x128xf32>,
    } else {
    }
    return
  }
  func.func @transform_0(%arg0: i32, %arg1: i32) -> (i32, i32, i32) {
    %c0_i32 = arith.constant 0 : i32
    %c0_i32_0 = arith.constant 0 : i32
    return %arg0, %arg1, %c0_i32 : i32, i32, i32
  }
  func.func @transform_1(%arg0: i32, %arg1: i32) -> (i32, i32) {
    %c0_i32 = arith.constant 0 : i32
    %c0_i32_0 = arith.constant 0 : i32
    %c0_i32_1 = arith.constant 0 : i32
    return %c0_i32, %c0_i32_0 : i32, i32
  }
  func.func @transform_2(%arg0: i32, %arg1: i32) -> (i32, i32) {
    %c0_i32 = arith.constant 0 : i32
    %c0_i32_0 = arith.constant 0 : i32
    %c0_i32_1 = arith.constant 0 : i32
    return %c0_i32, %c0_i32_0 : i32, i32
  }
  func.func @transform_3(%arg0: i32, %arg1: i32) -> (i32, i32, i32) {
    %c0_i32 = arith.constant 0 : i32
    %c0_i32_0 = arith.constant 0 : i32
    %c0_i32_1 = arith.constant 0 : i32
    return %arg0, %c0_i32, %c0_i32_0 : i32, i32, i32
  }
  func.func @transform_4(%arg0: i32, %arg1: i32) -> (i32, i32, i32) {
    %c0_i32 = arith.constant 0 : i32
    %c0_i32_0 = arith.constant 0 : i32
    return %arg0, %arg1, %c0_i32 : i32, i32, i32
  }
  func.func @transform_5(%arg0: i32, %arg1: i32) -> (i32, i32, i32) {
    %c0_i32 = arith.constant 0 : i32
    %c0_i32_0 = arith.constant 0 : i32
    %c0_i32_1 = arith.constant 0 : i32
    return %arg0, %c0_i32, %c0_i32_0 : i32, i32, i32
  }
  func.func @transform_6(%arg0: i32, %arg1: i32) -> (i32, i32, i32) {
    %c0_i32 = arith.constant 0 : i32
    %c0_i32_0 = arith.constant 0 : i32
    %c0_i32_1 = arith.constant 0 : i32
    return %arg0, %c0_i32, %c0_i32_0 : i32, i32, i32
  }
}

module attributes {stable_mosaic.version = 11 : i64} {
  func.func @_forward_kernel(%arg0: i32, %arg1: i32, %arg2: memref<1x16x32xf32, #tpu.memory_space<vmem>>, %arg3: memref<32x24xf32, #tpu.memory_space<vmem>>, %arg4: memref<1x24xf32, #tpu.memory_space<vmem>>, %arg5: memref<1x1x24xf32, #tpu.memory_space<vmem>>, %arg6: memref<1x16x24xbf16, #tpu.memory_space<vmem>>, %arg7: memref<1x1x24xf32, #tpu.memory_space<vmem>>, %arg8: memref<1x8x128xf32, #tpu.memory_space<vmem>>, %arg9: memref<1x24xf32, #tpu.memory_space<vmem>>, %arg10: memref<1x24xf32, #tpu.memory_space<vmem>>) attributes {dimension_semantics = [#tpu.dimension_semantics<parallel>, #tpu.dimension_semantics<arbitrary>], iteration_bounds = array<i64: 2, 3>, scalar_prefetch = 0 : i64, scratch_operands = 2 : i64, tpu.core_type = #tpu.core_type<tc>, window_params = [{transform_indices = @transform_0, window_bounds = array<i64: 1, 16, 32>}, {pipeline_mode = #tpu.pipeline_mode<synchronous>, transform_indices = @transform_1, window_bounds = array<i64: 32, 24>}, {pipeline_mode = #tpu.pipeline_mode<synchronous>, transform_indices = @transform_2, window_bounds = array<i64: 1, 24>}, {transform_indices = @transform_3, window_bounds = array<i64: 1, 1, 24>}, {transform_indices = @transform_4, window_bounds = array<i64: 1, 16, 24>}, {transform_indices = @transform_5, window_bounds = array<i64: 1, 1, 24>}, {transform_indices = @transform_6, window_bounds = array<i64: 1, 8, 128>}]} {
    %c0_i32 = arith.constant 0 : i32
    %0 = arith.cmpi eq, %arg1, %c0_i32 : i32
    %1 = arith.extui %0 : i1 to i32
    %c0_i32_0 = arith.constant 0 : i32
    %2 = arith.cmpi ne, %1, %c0_i32_0 : i32
    scf.if %2 {
      %cst_23 = arith.constant 0.000000e+00 : f32
      %38 = vector.broadcast %cst_23 : f32 to vector<1x24xf32>
      %c0_24 = arith.constant 0 : index
      %c0_25 = arith.constant 0 : index
      %39 = vector.load %arg9[%c0_24, %c0_25] : memref<1x24xf32, #tpu.memory_space<vmem>>, vector<1x24xf32>
      tpu.vector_store %arg9[%c0_24, %c0_25], %38 {strides = array<i32>} : memref<1x24xf32, #tpu.memory_space<vmem>>, vector<1x24xf32>,
      %cst_26 = arith.constant 0xFF800000 : f32
      %40 = vector.broadcast %cst_26 : f32 to vector<1x24xf32>
      %c0_27 = arith.constant 0 : index
      %c0_28 = arith.constant 0 : index
      %41 = vector.load %arg10[%c0_27, %c0_28] : memref<1x24xf32, #tpu.memory_space<vmem>>, vector<1x24xf32>
      tpu.vector_store %arg10[%c0_27, %c0_28], %40 {strides = array<i32>} : memref<1x24xf32, #tpu.memory_space<vmem>>, vector<1x24xf32>,
    } else {
    }
    %c0 = arith.constant 0 : index
    %c0_1 = arith.constant 0 : index
    %c0_2 = arith.constant 0 : index
    %3 = vector.load %arg2[%c0, %c0_1, %c0_2] : memref<1x16x32xf32, #tpu.memory_space<vmem>>, vector<1x16x32xf32>
    %4 = vector.shape_cast %3 : vector<1x16x32xf32> to vector<16x32xf32>
    %5 = arith.truncf %4 : vector<16x32xf32> to vector<16x32xbf16>
    %c0_3 = arith.constant 0 : index
    %c0_4 = arith.constant 0 : index
    %6 = vector.load %arg3[%c0_3, %c0_4] : memref<32x24xf32, #tpu.memory_space<vmem>>, vector<32x24xf32>
    %7 = arith.truncf %6 : vector<32x24xf32> to vector<32x24xbf16>
    %cst = arith.constant dense<0.000000e+00> : vector<16x24xf32>
    %8 = tpu.matmul %5, %7, %cst {dimension_numbers = #tpu.dot_dimension_numbers<[1], [0], [0], [1], [0, 0, 1, 1], [], []>} : vector<16x32xbf16>, vector<32x24xbf16>, vector<16x24xf32> -> vector<16x24xf32>
    %c0_5 = arith.constant 0 : index
    %c0_6 = arith.constant 0 : index
    %9 = vector.load %arg4[%c0_5, %c0_6] : memref<1x24xf32, #tpu.memory_space<vmem>>, vector<1x24xf32>
    %10 = vector.broadcast %9 : vector<1x24xf32> to vector<16x24xf32>
    %11 = arith.addf %8, %10 : vector<16x24xf32>
    %12 = vector.shape_cast %11 : vector<16x24xf32> to vector<1x16x24xf32>
    %13 = arith.truncf %12 : vector<1x16x24xf32> to vector<1x16x24xbf16>
    %c0_7 = arith.constant 0 : index
    %c0_8 = arith.constant 0 : index
    %c0_9 = arith.constant 0 : index
    %14 = vector.load %arg6[%c0_7, %c0_8, %c0_9] : memref<1x16x24xbf16, #tpu.memory_space<vmem>>, vector<1x16x24xbf16>
    tpu.vector_store %arg6[%c0_7, %c0_8, %c0_9], %13 {strides = array<i32>} : memref<1x16x24xbf16, #tpu.memory_space<vmem>>, vector<1x16x24xbf16>,
    %c16_i32 = arith.constant 16 : i32
    %15 = arith.muli %arg1, %c16_i32 : i32
    %16 = tpu.iota {dimensions = array<i32: 0>} : vector<16x24xi32>
    %17 = vector.broadcast %15 : i32 to vector<16x24xi32>
    %18 = arith.addi %17, %16 : vector<16x24xi32>
    %c40_i32 = arith.constant 40 : i32
    %19 = vector.broadcast %c40_i32 : i32 to vector<16x24xi32>
    %20 = arith.cmpi slt, %18, %19 : vector<16x24xi32>
    %cst_10 = arith.constant 0.000000e+00 : f32
    %21 = vector.shape_cast %20 : vector<16x24xi1> to vector<1x16x24xi1>
    %22 = vector.broadcast %cst_10 : f32 to vector<1x16x24xf32>
    %23 = arith.select %21, %12, %22 : vector<1x16x24xi1>, vector<1x16x24xf32>
    %cst_11 = arith.constant 0xFF800000 : f32
    %24 = vector.shape_cast %20 : vector<16x24xi1> to vector<1x16x24xi1>
    %25 = vector.broadcast %cst_11 : f32 to vector<1x16x24xf32>
    %26 = arith.select %24, %12, %25 : vector<1x16x24xi1>, vector<1x16x24xf32>
    %c0_12 = arith.constant 0 : index
    %c0_13 = arith.constant 0 : index
    %27 = vector.load %arg9[%c0_12, %c0_13] : memref<1x24xf32, #tpu.memory_space<vmem>>, vector<1x24xf32>
    %cst_14 = arith.constant dense<0.000000e+00> : vector<1x24xf32>
    %28 = vector.multi_reduction <add>, %23, %cst_14 [1] : vector<1x16x24xf32> to vector<1x24xf32>
    %29 = arith.addf %27, %28 : vector<1x24xf32>
    %c0_15 = arith.constant 0 : index
    %c0_16 = arith.constant 0 : index
    %30 = vector.load %arg9[%c0_15, %c0_16] : memref<1x24xf32, #tpu.memory_space<vmem>>, vector<1x24xf32>
    tpu.vector_store %arg9[%c0_15, %c0_16], %29 {strides = array<i32>} : memref<1x24xf32, #tpu.memory_space<vmem>>, vector<1x24xf32>,
    %c0_17 = arith.constant 0 : index
    %c0_18 = arith.constant 0 : index
    %31 = vector.load %arg10[%c0_17, %c0_18] : memref<1x24xf32, #tpu.memory_space<vmem>>, vector<1x24xf32>
    %cst_19 = arith.constant dense<0xFF800000> : vector<1x24xf32>
    %32 = vector.multi_reduction <maximumf>, %26, %cst_19 [1] : vector<1x16x24xf32> to vector<1x24xf32>
    %33 = arith.maximumf %31, %32 : vector<1x24xf32>
    %c0_20 = arith.constant 0 : index
    %c0_21 = arith.constant 0 : index
    %34 = vector.load %arg10[%c0_20, %c0_21] : memref<1x24xf32, #tpu.memory_space<vmem>>, vector<1x24xf32>
    tpu.vector_store %arg10[%c0_20, %c0_21], %33 {strides = array<i32>} : memref<1x24xf32, #tpu.memory_space<vmem>>, vector<1x24xf32>,
    %c2_i32 = arith.constant 2 : i32
    %35 = arith.cmpi eq, %arg1, %c2_i32 : i32
    %36 = arith.extui %35 : i1 to i32
    %c0_i32_22 = arith.constant 0 : i32
    %37 = arith.cmpi ne, %36, %c0_i32_22 : i32
    scf.if %37 {
      %c0_23 = arith.constant 0 : index
      %c0_24 = arith.constant 0 : index
      %38 = vector.load %arg9[%c0_23, %c0_24] : memref<1x24xf32, #tpu.memory_space<vmem>>, vector<1x24xf32>
      %cst_25 = arith.constant 2.500000e-02 : f32
      %39 = vector.broadcast %cst_25 : f32 to vector<1x24xf32>
      %40 = arith.mulf %38, %39 : vector<1x24xf32>
      %c0_26 = arith.constant 0 : index
      %c0_27 = arith.constant 0 : index
      %41 = vector.load %arg10[%c0_26, %c0_27] : memref<1x24xf32, #tpu.memory_space<vmem>>, vector<1x24xf32>
      %c0_28 = arith.constant 0 : index
      %c0_29 = arith.constant 0 : index
      %c0_30 = arith.constant 0 : index
      %42 = vector.load %arg5[%c0_28, %c0_29, %c0_30] : memref<1x1x24xf32, #tpu.memory_space<vmem>>, vector<1x1x24xf32>
      %43 = vector.shape_cast %42 : vector<1x1x24xf32> to vector<1x24xf32>
      %cst_31 = arith.constant 0.000000e+00 : f32
      %44 = vector.broadcast %cst_31 : f32 to vector<1x24xf32>
      %45 = arith.maximumf %40, %44 : vector<1x24xf32>
      %46 = arith.mulf %40, %43 : vector<1x24xf32>
      %47 = arith.subf %45, %46 : vector<1x24xf32>
      %48 = math.absf %40 : vector<1x24xf32>
      %cst_32 = arith.constant 0.000000e+00 : f32
      %49 = vector.broadcast %cst_32 : f32 to vector<1x24xf32>
      %50 = arith.subf %49, %48 : vector<1x24xf32>
      %51 = math.exp %50 : vector<1x24xf32>
      %52 = math.log1p %51 : vector<1x24xf32>
      %53 = arith.addf %47, %52 : vector<1x24xf32>
      %54 = vector.shape_cast %53 : vector<1x24xf32> to vector<1x1x24xf32>
      %cst_33 = arith.constant dense<0.000000e+00> : vector<1xf32>
      %55 = vector.multi_reduction <add>, %54, %cst_33 [1, 2] : vector<1x1x24xf32> to vector<1xf32>
      %56 = vector.shape_cast %55 : vector<1xf32> to vector<1x1x1xf32>
      %57 = vector.extract %56[0, 0, 0] : f32 from vector<1x1x1xf32>
      %cst_34 = arith.constant 5.000000e-01 : f32
      %58 = arith.mulf %57, %cst_34 : f32
      %cst_35 = arith.constant 0.000000e+00 : f32
      %59 = vector.broadcast %cst_35 : f32 to vector<1x24xf32>
      %60 = arith.maximumf %41, %59 : vector<1x24xf32>
      %61 = arith.mulf %41, %43 : vector<1x24xf32>
      %62 = arith.subf %60, %61 : vector<1x24xf32>
      %63 = math.absf %41 : vector<1x24xf32>
      %cst_36 = arith.constant 0.000000e+00 : f32
      %64 = vector.broadcast %cst_36 : f32 to vector<1x24xf32>
      %65 = arith.subf %64, %63 : vector<1x24xf32>
      %66 = math.exp %65 : vector<1x24xf32>
      %67 = math.log1p %66 : vector<1x24xf32>
      %68 = arith.addf %62, %67 : vector<1x24xf32>
      %69 = vector.shape_cast %68 : vector<1x24xf32> to vector<1x1x24xf32>
      %cst_37 = arith.constant dense<0.000000e+00> : vector<1xf32>
      %70 = vector.multi_reduction <add>, %69, %cst_37 [1, 2] : vector<1x1x24xf32> to vector<1xf32>
      %71 = vector.shape_cast %70 : vector<1xf32> to vector<1x1x1xf32>
      %72 = vector.extract %71[0, 0, 0] : f32 from vector<1x1x1xf32>
      %cst_38 = arith.constant 5.000000e-01 : f32
      %73 = arith.mulf %72, %cst_38 : f32
      %74 = arith.addf %58, %73 : f32
      %cst_39 = arith.constant 4.800000e+01 : f32
      %75 = arith.divf %74, %cst_39 : f32
      %c0_40 = arith.constant 0 : index
      %c0_41 = arith.constant 0 : index
      %c0_42 = arith.constant 0 : index
      %76 = vector.load %arg7[%c0_40, %c0_41, %c0_42] : memref<1x1x24xf32, #tpu.memory_space<vmem>>, vector<1x1x24xf32>
      %77 = vector.shape_cast %76 : vector<1x1x24xf32> to vector<1x24xf32>
      %78 = vector.shape_cast %40 : vector<1x24xf32> to vector<1x1x24xf32>
      tpu.vector_store %arg7[%c0_40, %c0_41, %c0_42], %78 {strides = array<i32>} : memref<1x1x24xf32, #tpu.memory_space<vmem>>, vector<1x1x24xf32>,
      %79 = vector.broadcast %75 : f32 to vector<1x8x128xf32>
      %c0_43 = arith.constant 0 : index
      %c0_44 = arith.constant 0 : index
      %c0_45 = arith.constant 0 : index
      %80 = vector.load %arg8[%c0_43, %c0_44, %c0_45] : memref<1x8x128xf32, #tpu.memory_space<vmem>>, vector<1x8x128xf32>
      tpu.vector_store %arg8[%c0_43, %c0_44, %c0_45], %79 {strides = array<i32>} : memref<1x8x128xf32, #tpu.memory_space<vmem>>, vector<1x8x128xf32>,
    } else {
    }
    return
  }
  func.func @transform_0(%arg0: i32, %arg1: i32) -> (i32, i32, i32) {
    %c0_i32 = arith.constant 0 : i32
    %c0_i32_0 = arith.constant 0 : i32
    return %arg0, %arg1, %c0_i32 : i32, i32, i32
  }
  func.func @transform_1(%arg0: i32, %arg1: i32) -> (i32, i32) {
    %c0_i32 = arith.constant 0 : i32
    %c0_i32_0 = arith.constant 0 : i32
    %c0_i32_1 = arith.constant 0 : i32
    return %c0_i32, %c0_i32_0 : i32, i32
  }
  func.func @transform_2(%arg0: i32, %arg1: i32) -> (i32, i32) {
    %c0_i32 = arith.constant 0 : i32
    %c0_i32_0 = arith.constant 0 : i32
    %c0_i32_1 = arith.constant 0 : i32
    return %c0_i32, %c0_i32_0 : i32, i32
  }
  func.func @transform_3(%arg0: i32, %arg1: i32) -> (i32, i32, i32) {
    %c0_i32 = arith.constant 0 : i32
    %c0_i32_0 = arith.constant 0 : i32
    %c0_i32_1 = arith.constant 0 : i32
    return %arg0, %c0_i32, %c0_i32_0 : i32, i32, i32
  }
  func.func @transform_4(%arg0: i32, %arg1: i32) -> (i32, i32, i32) {
    %c0_i32 = arith.constant 0 : i32
    %c0_i32_0 = arith.constant 0 : i32
    return %arg0, %arg1, %c0_i32 : i32, i32, i32
  }
  func.func @transform_5(%arg0: i32, %arg1: i32) -> (i32, i32, i32) {
    %c0_i32 = arith.constant 0 : i32
    %c0_i32_0 = arith.constant 0 : i32
    %c0_i32_1 = arith.constant 0 : i32
    return %arg0, %c0_i32, %c0_i32_0 : i32, i32, i32
  }
  func.func @transform_6(%arg0: i32, %arg1: i32) -> (i32, i32, i32) {
    %c0_i32 = arith.constant 0 : i32
    %c0_i32_0 = arith.constant 0 : i32
    %c0_i32_1 = arith.constant 0 : i32
    return %arg0, %c0_i32, %c0_i32_0 : i32, i32, i32
  }
}

</mosaic_0001>

<llo_original>
// kernel: tpu_custom_call.1
$region0: #{tpu_custom_call.1}
  #allocation0 [shape = 'u32[]', space=smem, size = 0x4, offset = 0x4, fixed_abs, tag = 'smem constant byte address 0x4 - core index']
  #allocation1 [shape = 'u32[144,128]{1,0:T(1,128)}', space=vmem, size = 0x12000, scoped, tag = 'internal scratch']
  #allocation2 [shape = 'f32[1,24]{1,0:T(1,128)}', space=vmem, size = 0x200, scoped, tag = 'scratch operand']
  #allocation3 [shape = 'f32[1,24]{1,0:T(1,128)}', space=vmem, size = 0x200, scoped, tag = 'scratch operand']
  %s0 = inlined_call_operand.vmem [shape: f32[2,40,32], index: 0, kind: input, shape index: {}]
  %s1 = inlined_call_operand.vmem [shape: f32[32,24], index: 1, kind: input, shape index: {}]
  %s2 = inlined_call_operand.vmem [shape: f32[1,24], index: 2, kind: input, shape index: {}]
  %s3 = inlined_call_operand.vmem [shape: f32[2,1,24], index: 3, kind: input, shape index: {}]
  %s4 = inlined_call_operand.vmem [shape: bf16[2,40,24], index: 4, kind: output, shape index: {0}]
  %s5 = inlined_call_operand.hbm [shape: f32[2,1,24], index: 5, kind: output, shape index: {1}]
  %s6 = inlined_call_operand.hbm [shape: f32[2,8,128], index: 6, kind: output, shape index: {2}]
  %7 = xla_tuple %s4, %s5, %s6
  %s8 = sld [smem:[#allocation0]]
  $region117: #{tpu_custom_call.1} parent=0
    _
  %s10 = ssub.s32 1, %s8
  %s11 = scalar_select 0, %s10, %s8
  $region1: #{tpu_custom_call.1} parent=0
    #allocation4 [shape = 'u8[8192]{0}', space=vmem, size = 0x2000, scoped, tag = 'output window, operand 0']
    #allocation5 [shape = 'u8[1024]{0}', space=vmem, size = 0x400, scoped, tag = 'output window, operand 1']
    #allocation6 [shape = 's32[2]{0}', space=sflag, size = 0x8, scoped, tag = 'scoped memory for tpu_custom_call.1']
    #allocation7 [shape = 'u8[8192]{0}', space=vmem, size = 0x2000, scoped, tag = 'output window, operand 2']
    #allocation8 [shape = 's32[2]{0}', space=sflag, size = 0x8, scoped, tag = 'scoped memory for tpu_custom_call.1']
    %12 = vsyncpa [#allocation6], 0
    %s13 = scalar_lea.sflag [#allocation6], 1
    %14 = vsyncpa %s13, 0
    %15 = vsyncpa [#allocation8], 0
    %s16 = scalar_lea.sflag [#allocation8], 1
    %17 = vsyncpa %s16, 0
    loop: start=0, step=1, limit=8
    $region2: #{tpu_custom_call.1} parent=1 // loop_pre_header
      _
    $region3: #{tpu_custom_call.1} parent=1 // loop_header
      %s19 = sphi 0, %s23
      %p20 = scmp.ge.s32.totalorder %s19, 8
      %s26 = sphi 0, %s38
      %s27 = sphi 0, %s34
      %s28 = sphi 0, %s26
      %s29 = sphi 0, %s27
      %s30 = sphi 0, %s28
      %s31 = sphi 0, %s29
      %s43 = sphi 0, %s45
      %s46 = sphi 0, %s43
      %s47 = sphi 0, %s46
      %s63 = sphi 0, %s47
      %s67 = sphi 0, %s67
      %s69 = sphi 0, %s67
      %s70 = sphi 0, %s69
      %s84 = sphi 0, %s70
      %s88 = sphi 0, %s88
      %s90 = sphi 0, %s88
      %s91 = sphi 0, %s90
      %s105 = sphi 0, %s91
      %s111 = sphi 0, %s113
      %s114 = sphi 0, %s111
      %s115 = sphi 0, %s114
      %s131 = sphi 0, %s115
      %s139 = sphi 0, %s141
      %s142 = sphi 0, %s139
      %s143 = sphi 0, %s142
      %s159 = sphi 0, %s143
      %s165 = sphi 0, %s167
      %s168 = sphi 0, %s165
      %s169 = sphi 0, %s168
      %s185 = sphi 0, %s169
      %s191 = sphi 0, %s193
      %s194 = sphi 0, %s191
      %s195 = sphi 0, %s194
      %s211 = sphi 0, %s195
    $region4: #{tpu_custom_call.1} parent=1 // loop_header_branch
      %22 = sbr.rel (%p20) target = $region8
    $region5: #{tpu_custom_call.1} parent=1 // loop_body
      %s24 = ssub.s32 %s19, 1
      %s25 = ssub.s32 %s19, 2
      %s32 = sadd.s32 1, %s27
      %p33 = scmp.ge.s32.totalorder %s32, 3
      %s34 = scalar_select %p33, 0, %s32
      %s35 = sadd.s32 1, %s26
      %s36 = scalar_select %p33, %s35, %s26
      %p37 = scmp.ge.s32.totalorder %s36, 2
      %s38 = scalar_select %p37, 0, %s36
      %s39 = ssub.s32 %s26, %s38
      %s40 = ssub.s32 %s27, %s34
      %s41 = sor.u32 %s39, %s40
      %p42 = scmp.eq.s32.totalorder %s41, 0
      %s44 = sadd.s32 %s43, 1
      %s45 = scalar_select %p42, %s43, %s44
      %p48 = pneg %p42
      %p49 = scmp.eq.s32.totalorder %s19, 5
      %p50 = por %p48, %p49
      %p51 = scmp.ne.s32.totalorder %s43, %s46
      %p52 = scmp.eq.s32.totalorder %s19, 0
      %p53 = por %p51, %p52
      %p54 = scmp.ne.s32.totalorder %s43, %s46
      %p55 = scmp.eq.s32.totalorder %s24, 5
      %p56 = por %p54, %p55
      %p57 = scmp.ne.s32.totalorder %s46, %s47
      %p58 = scmp.eq.s32.totalorder %s24, 0
      %p59 = por %p57, %p58
      %p60 = scmp.ne.s32.totalorder %s46, %s47
      %p61 = scmp.eq.s32.totalorder %s25, 5
      %p62 = por %p60, %p61
      %p64 = scmp.ne.s32.totalorder %s47, %s63
      %p65 = scmp.eq.s32.totalorder %s25, 0
      %p66 = por %p64, %p65
      %s68 = sadd.s32 %s67, 1
      %p71 = scmp.eq.s32.totalorder %s19, 5
      %p72 = scmp.ne.s32.totalorder %s67, %s69
      %p73 = scmp.eq.s32.totalorder %s19, 0
      %p74 = por %p72, %p73
      %p75 = scmp.ne.s32.totalorder %s67, %s69
      %p76 = scmp.eq.s32.totalorder %s24, 5
      %p77 = por %p75, %p76
      %p78 = scmp.ne.s32.totalorder %s69, %s70
      %p79 = scmp.eq.s32.totalorder %s24, 0
      %p80 = por %p78, %p79
      %p81 = scmp.ne.s32.totalorder %s69, %s70
      %p82 = scmp.eq.s32.totalorder %s25, 5
      %p83 = por %p81, %p82
      %p85 = scmp.ne.s32.totalorder %s70, %s84
      %p86 = scmp.eq.s32.totalorder %s25, 0
      %p87 = por %p85, %p86
      %s89 = sadd.s32 %s88, 1
      %p92 = scmp.eq.s32.totalorder %s19, 5
      %p93 = scmp.ne.s32.totalorder %s88, %s90
      %p94 = scmp.eq.s32.totalorder %s19, 0
      %p95 = por %p93, %p94
      %p96 = scmp.ne.s32.totalorder %s88, %s90
      %p97 = scmp.eq.s32.totalorder %s24, 5
      %p98 = por %p96, %p97
      %p99 = scmp.ne.s32.totalorder %s90, %s91
      %p100 = scmp.eq.s32.totalorder %s24, 0
      %p101 = por %p99, %p100
      %p102 = scmp.ne.s32.totalorder %s90, %s91
      %p103 = scmp.eq.s32.totalorder %s25, 5
      %p104 = por %p102, %p103
      %p106 = scmp.ne.s32.totalorder %s91, %s105
      %p107 = scmp.eq.s32.totalorder %s25, 0
      %p108 = por %p106, %p107
      %s109 = ssub.s32 %s26, %s38
      %p110 = scmp.eq.s32.totalorder %s109, 0
      %s112 = sadd.s32 %s111, 1
      %s113 = scalar_select %p110, %s111, %s112
      %p116 = pneg %p110
      %p117 = scmp.eq.s32.totalorder %s19, 5
      %p118 = por %p116, %p117
      %p119 = scmp.ne.s32.totalorder %s111, %s114
      %p120 = scmp.eq.s32.totalorder %s19, 0
      %p121 = por %p119, %p120
      %p122 = scmp.ne.s32.totalorder %s111, %s114
      %p123 = scmp.eq.s32.totalorder %s24, 5
      %p124 = por %p122, %p123
      %p125 = scmp.ne.s32.totalorder %s114, %s115
      %p126 = scmp.eq.s32.totalorder %s24, 0
      %p127 = por %p125, %p126
      %p128 = scmp.ne.s32.totalorder %s114, %s115
      %p129 = scmp.eq.s32.totalorder %s25, 5
      %p130 = por %p128, %p129
      %p132 = scmp.ne.s32.totalorder %s115, %s131
      %p133 = scmp.eq.s32.totalorder %s25, 0
      %p134 = por %p132, %p133
      %s135 = ssub.s32 %s26, %s38
      %s136 = ssub.s32 %s27, %s34
      %s137 = sor.u32 %s135, %s136
      %p138 = scmp.eq.s32.totalorder %s137, 0
      %s140 = sadd.s32 %s139, 1
      %s141 = scalar_select %p138, %s139, %s140
      %p144 = pneg %p138
      %p145 = scmp.eq.s32.totalorder %s19, 5
      %p146 = por %p144, %p145
      %p147 = scmp.ne.s32.totalorder %s139, %s142
      %p148 = scmp.eq.s32.totalorder %s19, 0
      %p149 = por %p147, %p148
      %p150 = scmp.ne.s32.totalorder %s139, %s142
      %p151 = scmp.eq.s32.totalorder %s24, 5
      %p152 = por %p150, %p151
      %p153 = scmp.ne.s32.totalorder %s142, %s143
      %p154 = scmp.eq.s32.totalorder %s24, 0
      %p155 = por %p153, %p154
      %p156 = scmp.ne.s32.totalorder %s142, %s143
      %p157 = scmp.eq.s32.totalorder %s25, 5
      %p158 = por %p156, %p157
      %p160 = scmp.ne.s32.totalorder %s143, %s159
      %p161 = scmp.eq.s32.totalorder %s25, 0
      %p162 = por %p160, %p161
      %s163 = ssub.s32 %s26, %s38
      %p164 = scmp.eq.s32.totalorder %s163, 0
      %s166 = sadd.s32 %s165, 1
      %s167 = scalar_select %p164, %s165, %s166
      %p170 = pneg %p164
      %p171 = scmp.eq.s32.totalorder %s19, 5
      %p172 = por %p170, %p171
      %p173 = scmp.ne.s32.totalorder %s165, %s168
      %p174 = scmp.eq.s32.totalorder %s19, 0
      %p175 = por %p173, %p174
      %p176 = scmp.ne.s32.totalorder %s165, %s168
      %p177 = scmp.eq.s32.totalorder %s24, 5
      %p178 = por %p176, %p177
      %p179 = scmp.ne.s32.totalorder %s168, %s169
      %p180 = scmp.eq.s32.totalorder %s24, 0
      %p181 = por %p179, %p180
      %p182 = scmp.ne.s32.totalorder %s168, %s169
      %p183 = scmp.eq.s32.totalorder %s25, 5
      %p184 = por %p182, %p183
      %p186 = scmp.ne.s32.totalorder %s169, %s185
      %p187 = scmp.eq.s32.totalorder %s25, 0
      %p188 = por %p186, %p187
      %s189 = ssub.s32 %s26, %s38
      %p190 = scmp.eq.s32.totalorder %s189, 0
      %s192 = sadd.s32 %s191, 1
      %s193 = scalar_select %p190, %s191, %s192
      %p196 = pneg %p190
      %p197 = scmp.eq.s32.totalorder %s19, 5
      %p198 = por %p196, %p197
      %p199 = scmp.ne.s32.totalorder %s191, %s194
      %p200 = scmp.eq.s32.totalorder %s19, 0
      %p201 = por %p199, %p200
      %p202 = scmp.ne.s32.totalorder %s191, %s194
      %p203 = scmp.eq.s32.totalorder %s24, 5
      %p204 = por %p202, %p203
      %p205 = scmp.ne.s32.totalorder %s194, %s195
      %p206 = scmp.eq.s32.totalorder %s24, 0
      %p207 = por %p205, %p206
      %p208 = scmp.ne.s32.totalorder %s194, %s195
      %p209 = scmp.eq.s32.totalorder %s25, 5
      %p210 = por %p208, %p209
      %p212 = scmp.ne.s32.totalorder %s195, %s211
      %p213 = scmp.eq.s32.totalorder %s25, 0
      %p214 = por %p212, %p213
      %p215 = scmp.le.s32.totalorder 1, %s19
      %p216 = scmp.lt.s32.totalorder %s19, 7
      %p217 = pnand %p215, %p216
      %p218 = pneg %p217
      // Predicated region
      $region9: #{tpu_custom_call.1} parent=5 // pred_check
        _
      $region10: #{tpu_custom_call.1} parent=5 // pred_check_branch
        %220 = sbr.rel (%p217) target = $region12
      $region11: #{tpu_custom_call.1} parent=5 // pred_region
        %s221 = ssub.s32 %s19, 1
        // Predicated region
        $region13: #{tpu_custom_call.1} parent=11 // pred_check
          %p222 = pneg %p80
        $region14: #{tpu_custom_call.1} parent=11 // pred_check_branch
          %224 = sbr.rel (%p222) target = $region16
        $region15: #{tpu_custom_call.1} parent=11 // pred_region
          _
        $region16: #{tpu_custom_call.1} parent=11 // pred_fallthru
          _
        // Predicated region
        $region17: #{tpu_custom_call.1} parent=11 // pred_check
          %p225 = pneg %p101
        $region18: #{tpu_custom_call.1} parent=11 // pred_check_branch
          %227 = sbr.rel (%p225) target = $region20
        $region19: #{tpu_custom_call.1} parent=11 // pred_region
          _
        $region20: #{tpu_custom_call.1} parent=11 // pred_fallthru
          _
      $region12: #{tpu_custom_call.1} parent=5 // pred_fallthru
        _
      %p228 = scmp.lt.s32.totalorder %s19, 6
      // Predicated region
      $region21: #{tpu_custom_call.1} parent=5 // pred_check
        %p229 = pneg %p228
      $region22: #{tpu_custom_call.1} parent=5 // pred_check_branch
        %231 = sbr.rel (%p229) target = $region24
      $region23: #{tpu_custom_call.1} parent=5 // pred_region
        // Predicated region
        $region25: #{tpu_custom_call.1} parent=23 // pred_check
          %p232 = pneg %p53
        $region26: #{tpu_custom_call.1} parent=23 // pred_check_branch
          %234 = sbr.rel (%p232) target = $region28
        $region27: #{tpu_custom_call.1} parent=23 // pred_region
          %s235 = smul.u32 2, %s27
          %s236 = ssub.s32 5, %s235
          %p237 = scmp.lt.s32.totalorder %s236, 2
          %s238 = scalar_select %p237, %s236, 2
          %s239 = smul.u32 128, %s238
          %p240 = scmp.lt.s32.totalorder %s26, 1
          %s241 = scalar_select %p240, %s26, 1
          %p242 = scmp.lt.s32.totalorder %s235, 4
          %s243 = scalar_select %p242, %s235, 4
          %s244 = smul.addr %s241, 5
          %s245 = sadd.s32 %s243, %s244
          %s246 = smul.addr %s245, 8
          %s247 = scalar_lea.vmem %s0, %s246
          %s248 = smul.u32 2, %s27
          %s249 = ssub.s32 5, %s248
          %p250 = scmp.lt.s32.totalorder %s249, 2
          %s251 = scalar_select %p250, %s249, 2
          %s252 = smul.u32 128, %s251
        $region28: #{tpu_custom_call.1} parent=23 // pred_fallthru
          _
        // Predicated region
        $region29: #{tpu_custom_call.1} parent=23 // pred_check
          %p253 = pneg %p121
        $region30: #{tpu_custom_call.1} parent=23 // pred_check_branch
          %255 = sbr.rel (%p253) target = $region32
        $region31: #{tpu_custom_call.1} parent=23 // pred_region
          %p256 = scmp.lt.s32.totalorder %s26, 1
          %s257 = scalar_select %p256, %s26, 1
          %s258 = scalar_lea.vmem %s3, %s257
        $region32: #{tpu_custom_call.1} parent=23 // pred_fallthru
          _
      $region24: #{tpu_custom_call.1} parent=5 // pred_fallthru
        _
      %p259 = scmp.le.s32.totalorder 1, %s19
      %p260 = scmp.lt.s32.totalorder %s19, 7
      %p261 = pnand %p259, %p260
      %p262 = pneg %p261
      // Predicated region
      $region33: #{tpu_custom_call.1} parent=5 // pred_check
        _
      $region34: #{tpu_custom_call.1} parent=5 // pred_check_branch
        %264 = sbr.rel (%p261) target = $region36
      $region35: #{tpu_custom_call.1} parent=5 // pred_region
        %s265 = ssub.s32 %s19, 1
        %s266 = smul.u32 2, %s29
        %s267 = ssub.s32 5, %s266
        %p268 = scmp.lt.s32.totalorder %s267, 2
        %s269 = scalar_select %p268, %s267, 2
        %s270 = smul.u32 128, %s269
        %p271 = scmp.lt.s32.totalorder %s28, 1
        %s272 = scalar_select %p271, %s28, 1
        %p273 = scmp.lt.s32.totalorder %s266, 4
        %s274 = scalar_select %p273, %s266, 4
        %s275 = smul.addr %s272, 5
        %s276 = sadd.s32 %s274, %s275
        %s277 = smul.addr %s276, 8
        %s278 = scalar_lea.vmem %s0, %s277
        %p279 = pneg %p59
        %p280 = pneg %p56
        %p281 = pneg %p80
        %p282 = pneg %p77
        %p283 = pneg %p101
        %p284 = pneg %p98
        %p285 = scmp.lt.s32.totalorder %s28, 1
        %s286 = scalar_select %p285, %s28, 1
        %s287 = scalar_lea.vmem %s3, %s286
        %p288 = pneg %p127
        %p289 = pneg %p124
        %p290 = pneg %p155
        %p291 = pneg %p152
        %s292 = sand.u32 %s142, 1
        %s293 = sand.u32 %s142, 1
        %s294 = smul.addr %s293, 8
        %s295 = scalar_lea.vmem [#allocation4], %s294
        %p296 = pneg %p181
        %p297 = pneg %p178
        %s298 = sand.u32 %s168, 1
        %s299 = scalar_lea.sflag [#allocation6], %s298
        %s300 = sand.u32 %s168, 1
        %s301 = scalar_lea.vmem [#allocation5], %s300
        %p302 = pneg %p207
        %p303 = pneg %p204
        %s304 = sand.u32 %s194, 1
        %s305 = scalar_lea.sflag [#allocation8], %s304
        %s306 = sand.u32 %s194, 1
        %s307 = smul.addr %s306, 8
        %s308 = scalar_lea.vmem [#allocation7], %s307
        %s309 = smul.u32 2, %s29
        %s310 = ssub.s32 5, %s309
        %p311 = scmp.lt.s32.totalorder %s310, 2
        %s312 = scalar_select %p311, %s310, 2
        %s313 = smul.u32 128, %s312
        %p314 = scmp.lt.s32.totalorder %s28, 1
        %s315 = scalar_select %p314, %s28, 1
        %p316 = scmp.lt.s32.totalorder %s309, 4
        %s317 = scalar_select %p316, %s309, 4
        %s318 = smul.addr %s315, 5
        %s319 = sadd.s32 %s317, %s318
        %s320 = smul.addr %s319, 8
        %s321 = scalar_lea.vmem %s0, %s320
        %s322 = smul.u32 2, %s29
        %s323 = ssub.s32 5, %s322
        %p324 = scmp.lt.s32.totalorder %s323, 2
        %s325 = scalar_select %p324, %s323, 2
        %s326 = smul.u32 128, %s325
        %p327 = scmp.lt.s32.totalorder %s28, 1
        %s328 = scalar_select %p327, %s28, 1
        %s329 = scalar_lea.vmem %s3, %s328
        %s330 = smul.u32 2, %s29
        %s331 = ssub.s32 5, %s330
        %p332 = scmp.lt.s32.totalorder %s331, 2
        %s333 = scalar_select %p332, %s331, 2
        %s334 = smul.u32 64, %s333
        %p336 = scmp.eq.s32.totalorder %s29, 0
        // Predicated region
        $region37: #{tpu_custom_call.1} parent=35 // pred_check
          %p337 = pneg %p336
        $region38: #{tpu_custom_call.1} parent=35 // pred_check_branch
          %339 = sbr.rel (%p337) target = $region40
        $region39: #{tpu_custom_call.1} parent=35 // pred_region
          %vm340 = vcmask 188416
          %341 = vst.msk [vmem:[#allocation2] sm:$0x1] %vm340, 0.0
          %342 = vst.msk [vmem:[#allocation3] sm:$0x1] %vm340, -inf
        $region40: #{tpu_custom_call.1} parent=35 // pred_fallthru
          _
        %v343 = vld [vmem:[%s321] sm:$0xff]
        %v344 = vld [vmem:[%s321 + $0x8] sm:$0xff]
        %v345 = vpack.c.bf16 %v344, %v343
        %v346 = vld [vmem:[%s1] sm:$0xff]
        %v347 = vld [vmem:[%s1 + $0x8] sm:$0xff]
        %v348 = vld [vmem:[%s1 + $0x10] sm:$0xff]
        %v349 = vld [vmem:[%s1 + $0x18] sm:$0xff]
        %v350 = vpack.c.bf16 %v347, %v346
        %v351 = vpack.c.bf16 %v349, %v348
        %v352 = vld [vmem:[%s2] sm:$0x1]
        %v354 = vlaneseq
        %v355 = vshrl.u32 %v354, 7
        %v356 = vsub.s32 0, %v355
        %v357 = vrot.slane %v352, %v356
        %vm359 = vcmask 261120
        %v361 = vsel %vm359, %v345, 0
        %363 = vmatprep.subr.bf16.mxu0 0
        %364 = vmatpush1.bf16.msra.mxu0 %v350
        %365 = vmatprep.subr.bf16.mxu0 0
        %366 = vmatpush1.bf16.msra.mxu0 %v351
        %367 = vmatprep.subr.bf16.mxu0 0
        %368 = vmatpush1.bf16.msra.mxu0 0
        %369 = vmatprep.subr.bf16.mxu0 0
        %370 = vmatpush1.bf16.msra.mxu0 0
        %371 = vmatprep.subr.bf16.mxu0 0
        %372 = vmatpush1.bf16.msra.mxu0 0
        %373 = vmatprep.subr.bf16.mxu0 0
        %374 = vmatpush1.bf16.msra.mxu0 0
        %375 = vmatprep.subr.bf16.mxu0 0
        %376 = vmatpush1.bf16.msra.mxu0 0
        %377 = vmatprep.subr.bf16.mxu0 0
        %378 = vmatpush1.bf16.msra.mxu0 0
        %379 = vmatprep.subr.bf16.mxu0 0
        %380 = vmatpush1.bf16.msra.mxu0 0
        %381 = vmatprep.subr.bf16.mxu0 0
        %382 = vmatpush1.bf16.msra.mxu0 0
        %383 = vmatprep.subr.bf16.mxu0 0
        %384 = vmatpush1.bf16.msra.mxu0 0
        %385 = vmatprep.subr.bf16.mxu0 0
        %386 = vmatpush1.bf16.msra.mxu0 0
        %387 = vmatprep.subr.bf16.mxu0 0
        %388 = vmatpush1.bf16.msra.mxu0 0
        %389 = vmatprep.subr.bf16.mxu0 0
        %390 = vmatpush1.bf16.msra.mxu0 0
        %391 = vmatprep.subr.bf16.mxu0 0
        %392 = vmatpush1.bf16.msra.mxu0 0
        %393 = vmatprep.subr.bf16.mxu0 0
        %394 = vmatpush1.bf16.msra.mxu0 0
        %395 = vmatprep.mubr.bf16.mxu0 0
        %396 = vmatmul.mubr.bf16.gmra.mrb[0].mxu0 %v361
        %v397 = vpop.f32.mrb[0].mxu0
        %v398 = vadd.f32 %v357, %v397
        %v399 = vpop.f32.mrb[0].mxu0
        %v400 = vpop.f32.mrb[0].mxu0
        %v401 = vadd.f32 %v357, %v400
        %v402 = vpop.f32.mrb[0].mxu0
        %403 = vdwg.mxu0
        %v404 = vpack.c.bf16 %v401, %v398
        %v406 = vunpack.c.l.b16 %v404
        %v407 = vunpack.c.h.b16 %v404
        %v408 = vpack.c.b16 %v406, %v406
        %v409 = vpack.c.b16 %v407, %v407
        %vm412 = vcmask 191488
        %413 = vst.msk [vmem:[%s295] sm:$0xf] %vm412, %v408
        %414 = vst.msk [vmem:[%s295 + $0x4] sm:$0xf] %vm412, %v409
        %s415 = smul.u32 %s29, 16
        %v416 = vlaneseq
        %v417 = vshrl.u32 %v416, 7
        %v418 = vadd.s32 %v417, 8
        %v419 = vstv %s415
        %v420 = vadd.s32 %v419, %v417
        %v421 = vadd.s32 %v419, %v418
        %vm422 = vcmp.lt.s32.totalorder %v420, 40
        %vm423 = vcmp.lt.s32.totalorder %v421, 40
        %v424 = vsel %vm422, %v398, 0.0
        %v425 = vsel %vm423, %v401, 0.0
        %v426 = vsel %vm422, %v398, -inf
        %v427 = vsel %vm423, %v401, -inf
        %v428 = vld [vmem:[#allocation2] sm:$0x1]
        %vm429 = vcmask 195584
        %v430 = vsel %vm429, %v424, 0.0
        %v431 = vsel %vm429, %v425, 0.0
        %v432 = vadd.f32 %v430, %v431
        %v433 = vrot.slane %v432, 4
        %v434 = vadd.f32 %v432, %v433
        %v435 = vrot.slane %v434, 2
        %v436 = vadd.f32 %v434, %v435
        %v437 = vrot.slane %v436, 1
        %v438 = vadd.f32 %v436, %v437
        %v439 = vadd.f32 %v428, %v438
        %vm440 = vcmask 188416
        %441 = vst.msk [vmem:[#allocation2] sm:$0x1] %vm440, %v439
        %v442 = vld [vmem:[#allocation3] sm:$0x1]
        %v443 = vsel %vm429, %v426, -inf
        %v444 = vsel %vm429, %v427, -inf
        %v445 = vmax.f32 %v443, %v444
        %v446 = vrot.slane %v445, 4
        %v447 = vmax.f32 %v445, %v446
        %v448 = vrot.slane %v447, 2
        %v449 = vmax.f32 %v447, %v448
        %v450 = vrot.slane %v449, 1
        %v451 = vmax.f32 %v449, %v450
        %v452 = vmax.f32 %v442, %v451
        %453 = vst.msk [vmem:[#allocation3] sm:$0x1] %vm440, %v452
        %p454 = scmp.eq.s32.totalorder %s29, 2
        // Predicated region
        $region41: #{tpu_custom_call.1} parent=35 // pred_check
          %p455 = pneg %p454
        $region42: #{tpu_custom_call.1} parent=35 // pred_check_branch
          %457 = sbr.rel (%p455) target = $region44
        $region43: #{tpu_custom_call.1} parent=35 // pred_region
          %v458 = vld [vmem:[#allocation2] sm:$0x1]
          %v459 = vmul.f32 %v458, 0.025
          %v460 = vld [vmem:[#allocation3] sm:$0x1]
          %v461 = vld [vmem:[%s329] sm:$0x1]
          %v462 = vmax.f32 %v459, 0.0
          %v463 = vmul.f32 %v459, %v461
          %v464 = vsub.f32 %v462, %v463
          %v465 = vand.u32 2147483647, %v459
          %v466 = vsub.f32 0.0, %v465
          %v467 = vmul.f32 %v466, 1.442695
          %v468 = vpow.pop %v467
          %v469 = vadd.f32 %v468, 1.0
          %v470 = vlog2.pop %v469
          %v471 = vmul.f32 %v470, 0.6931472
          %v472 = vmul.f32 -0.5, %v468
          %v473 = vadd.f32 %v472, 1.0
          %v474 = vmul.f32 %v473, %v468
          %v475 = vand.u32 2147483647, %v468
          %vm476 = vcmp.lt.f32.partialorder %v475, 0.0004427343
          %v477 = vsel %vm476, %v474, %v471
          %v478 = vadd.f32 %v464, %v477
          %v479 = vsel %vm440, %v478, 0.0
          %480 = vadd.xlane.f32.xlu0 %v479
          %v481 = vpop.xlane.xlu0 %480
          %v482 = vrot.slane %v481, 4
          %v483 = vadd.f32 %v481, %v482
          %v484 = vrot.slane %v483, 2
          %v485 = vadd.f32 %v483, %v484
          %v486 = vrot.slane %v485, 1
          %v487 = vadd.f32 %v485, %v486
          %s488 = vtos %v487
          %s489 = smul.f32 %s488, 0.5
          %v490 = vmax.f32 %v460, 0.0
          %v491 = vmul.f32 %v460, %v461
          %v492 = vsub.f32 %v490, %v491
          %v493 = vand.u32 2147483647, %v460
          %v494 = vsub.f32 0.0, %v493
          %v495 = vmul.f32 %v494, 1.442695
          %v496 = vpow.pop %v495
          %v497 = vadd.f32 %v496, 1.0
          %v498 = vlog2.pop %v497
          %v499 = vmul.f32 %v498, 0.6931472
          %v500 = vmul.f32 -0.5, %v496
          %v501 = vadd.f32 %v500, 1.0
          %v502 = vmul.f32 %v501, %v496
          %v503 = vand.u32 2147483647, %v496
          %vm504 = vcmp.lt.f32.partialorder %v503, 0.0004427343
          %v505 = vsel %vm504, %v502, %v499
          %v506 = vadd.f32 %v492, %v505
          %v507 = vsel %vm440, %v506, 0.0
          %508 = vadd.xlane.f32.xlu0 %v507
          %v509 = vpop.xlane.xlu0 %508
          %v510 = vrot.slane %v509, 4
          %v511 = vadd.f32 %v509, %v510
          %v512 = vrot.slane %v511, 2
          %v513 = vadd.f32 %v511, %v512
          %v514 = vrot.slane %v513, 1
          %v515 = vadd.f32 %v513, %v514
          %s516 = vtos %v515
          %s517 = smul.f32 %s516, 0.5
          %s518 = sadd.f32 %s489, %s517
          %v519 = vrcp.pop 48.0
          %s520 = vtos %v519
          %s521 = smul.f32 %s518, %s520
          %522 = vst.msk [vmem:[%s301] sm:$0x1] %vm440, %v459
          %v523 = vstv %s521
          %524 = vst [vmem:[%s308] sm:$0xff] %v523
        $region44: #{tpu_custom_call.1} parent=35 // pred_fallthru
          _
        %s525 = sand.u32 %s142, 1
        %s526 = sand.u32 %s142, 1
        %s527 = smul.addr %s526, 8
        %s528 = scalar_lea.vmem [#allocation4], %s527
        %s529 = sand.u32 %s168, 1
        %s530 = scalar_lea.sflag [#allocation6], %s529
        %s531 = sand.u32 %s168, 1
        %s532 = scalar_lea.vmem [#allocation5], %s531
        %s533 = sand.u32 %s194, 1
        %s534 = scalar_lea.sflag [#allocation8], %s533
        %s535 = sand.u32 %s194, 1
        %s536 = smul.addr %s535, 8
        %s537 = scalar_lea.vmem [#allocation7], %s536
        // Predicated region
        $region45: #{tpu_custom_call.1} parent=35 // pred_check
          %p538 = pneg %p152
        $region46: #{tpu_custom_call.1} parent=35 // pred_check_branch
          %540 = sbr.rel (%p538) target = $region48
        $region47: #{tpu_custom_call.1} parent=35 // pred_region
          %s541 = smul.u32 2, %s29
          %s542 = ssub.s32 5, %s541
          %p543 = scmp.lt.s32.totalorder %s542, 2
          %s544 = scalar_select %p543, %s542, 2
          %s545 = smul.u32 64, %s544
          %p546 = scmp.ne.s32.totalorder 0, %s545
          %s547 = smul.addr %s28, 5
          %s548 = sadd.s32 %s541, %s547
          %s549 = smul.addr %s548, 4
          %s550 = scalar_lea.vmem %s4, %s549
          // Predicated region
          $region49: #{tpu_custom_call.1} parent=47 // pred_check
            %p551 = pneg %p546
          $region50: #{tpu_custom_call.1} parent=47 // pred_check_branch
            %553 = sbr.rel (%p551) target = $region52
          $region51: #{tpu_custom_call.1} parent=47 // pred_region
            // Predicated region
            $region53: #{tpu_custom_call.1} parent=51 // pred_check
              _
            $region54: #{tpu_custom_call.1} parent=51 // pred_check_branch
              %555 = sbr.rel target = $region56
            $region55: #{tpu_custom_call.1} parent=51 // pred_region
              // Predicated region
              $region75: #{tpu_custom_call.1} parent=55 // pred_check
                _
              $region76: #{tpu_custom_call.1} parent=55 // pred_check_branch
                %606 = sbr.rel (0) target = $region78
              $region77: #{tpu_custom_call.1} parent=55 // pred_region
                %s608 = sshrl.u32 %s544, 1
                // While loop
                $region79: #{tpu_custom_call.1} parent=77 // loop_pre_header
                  _
                $region80: #{tpu_custom_call.1} parent=77 // loop_header
                  %s610 = sphi 0, %s612
                  %p611 = scmp.ge.s32.totalorder %s610, %s608
                  %s615 = sphi 0, %s624
                  %s616 = sphi %s528, %s627
                  %s617 = sphi %s550, %s628
                $region81: #{tpu_custom_call.1} parent=77 // loop_header_branch
                  %614 = sbr.rel (%p611) target = $region85
                $region82: #{tpu_custom_call.1} parent=77 // loop_body
                  %v618 = vld [vmem:[%s616] sm:$0xf]
                  %619 = vst [vmem:[%s617] sm:$0xf] %v618
                  %v620 = vld [vmem:[%s616 + $0x4] sm:$0xf]
                  %621 = vst [vmem:[%s617 + $0x4] sm:$0xf] %v620
                  %s622 = sadd.s32 1, %s615
                  %p623 = scmp.ge.s32.totalorder %s622, %s608
                  %s624 = scalar_select %p623, 0, %s622
                  %s625 = smul.u32 %s624, 8
                  %s626 = smul.u32 %s624, 8
                  %s627 = scalar_lea.vmem %s528, %s625 [#allocation4]
                  %s628 = scalar_lea.vmem %s550, %s626
                $region83: #{tpu_custom_call.1} parent=77 // loop_footer
                  %s612 = sadd.s32 %s610, 1
                $region84: #{tpu_custom_call.1} parent=77 // loop_footer_branch
                  %609 = sbr.rel target = $region80
                $region85: #{tpu_custom_call.1} parent=77 // loop_exit
                  _
                %s629 = sshrl.u32 %s544, 1
                %s630 = sand.u32 %s544, 1
                %s631 = smul.u32 %s629, 2
                %s632 = smul.u32 4, %s631
                %s633 = scalar_lea.vmem %s528, %s632 [#allocation4]
                %s634 = smul.u32 4, %s631
                %s635 = scalar_lea.vmem %s550, %s634
                // While loop
                $region86: #{tpu_custom_call.1} parent=77 // loop_pre_header
                  _
                $region87: #{tpu_custom_call.1} parent=77 // loop_header
                  %s637 = sphi 0, %s639
                  %p638 = scmp.ge.s32.totalorder %s637, %s630
                  %s642 = sphi 0, %s649
                  %s643 = sphi %s633, %s652
                  %s644 = sphi %s635, %s653
                $region88: #{tpu_custom_call.1} parent=77 // loop_header_branch
                  %641 = sbr.rel (%p638) target = $region92
                $region89: #{tpu_custom_call.1} parent=77 // loop_body
                  %v645 = vld [vmem:[%s643] sm:$0xf]
                  %646 = vst [vmem:[%s644] sm:$0xf] %v645
                  %s647 = sadd.s32 1, %s642
                  %p648 = scmp.ge.s32.totalorder %s647, %s630
                  %s649 = scalar_select %p648, 0, %s647
                  %s650 = smul.u32 %s649, 4
                  %s651 = smul.u32 %s649, 4
                  %s652 = scalar_lea.vmem %s633, %s650 [#allocation4]
                  %s653 = scalar_lea.vmem %s635, %s651
                $region90: #{tpu_custom_call.1} parent=77 // loop_footer
                  %s639 = sadd.s32 %s637, 1
                $region91: #{tpu_custom_call.1} parent=77 // loop_footer_branch
                  %636 = sbr.rel target = $region87
                $region92: #{tpu_custom_call.1} parent=77 // loop_exit
                  _
              $region78: #{tpu_custom_call.1} parent=55 // pred_fallthru
                _
            $region56: #{tpu_custom_call.1} parent=51 // pred_fallthru
              _
            // Predicated region
            $region57: #{tpu_custom_call.1} parent=51 // pred_check
              _
            $region58: #{tpu_custom_call.1} parent=51 // pred_check_branch
              %557 = sbr.rel (0) target = $region60
            $region59: #{tpu_custom_call.1} parent=51 // pred_region
              %s559 = sshrl.u32 %s544, 1
              // While loop
              $region61: #{tpu_custom_call.1} parent=59 // loop_pre_header
                _
              $region62: #{tpu_custom_call.1} parent=59 // loop_header
                %s561 = sphi 0, %s563
                %p562 = scmp.ge.s32.totalorder %s561, %s559
                %s566 = sphi 0, %s575
                %s567 = sphi %s528, %s578
                %s568 = sphi %s550, %s579
              $region63: #{tpu_custom_call.1} parent=59 // loop_header_branch
                %565 = sbr.rel (%p562) target = $region67
              $region64: #{tpu_custom_call.1} parent=59 // loop_body
                %v569 = vld [vmem:[%s567] sm:$0xf]
                %570 = vst [vmem:[%s568] sm:$0xf] %v569
                %v571 = vld [vmem:[%s567 + $0x4] sm:$0xf]
                %572 = vst [vmem:[%s568 + $0x4] sm:$0xf] %v571
                %s573 = sadd.s32 1, %s566
                %p574 = scmp.ge.s32.totalorder %s573, %s559
                %s575 = scalar_select %p574, 0, %s573
                %s576 = smul.u32 %s575, 8
                %s577 = smul.u32 %s575, 8
                %s578 = scalar_lea.vmem %s528, %s576 [#allocation4]
                %s579 = scalar_lea.vmem %s550, %s577
              $region65: #{tpu_custom_call.1} parent=59 // loop_footer
                %s563 = sadd.s32 %s561, 1
              $region66: #{tpu_custom_call.1} parent=59 // loop_footer_branch
                %560 = sbr.rel target = $region62
              $region67: #{tpu_custom_call.1} parent=59 // loop_exit
                _
              %s580 = sshrl.u32 %s544, 1
              %s581 = sand.u32 %s544, 1
              %s582 = smul.u32 %s580, 2
              %s583 = smul.u32 4, %s582
              %s584 = scalar_lea.vmem %s528, %s583 [#allocation4]
              %s585 = smul.u32 4, %s582
              %s586 = scalar_lea.vmem %s550, %s585
              // While loop
              $region68: #{tpu_custom_call.1} parent=59 // loop_pre_header
                _
              $region69: #{tpu_custom_call.1} parent=59 // loop_header
                %s588 = sphi 0, %s590
                %p589 = scmp.ge.s32.totalorder %s588, %s581
                %s593 = sphi 0, %s600
                %s594 = sphi %s584, %s603
                %s595 = sphi %s586, %s604
              $region70: #{tpu_custom_call.1} parent=59 // loop_header_branch
                %592 = sbr.rel (%p589) target = $region74
              $region71: #{tpu_custom_call.1} parent=59 // loop_body
                %v596 = vld [vmem:[%s594] sm:$0xf]
                %597 = vst [vmem:[%s595] sm:$0xf] %v596
                %s598 = sadd.s32 1, %s593
                %p599 = scmp.ge.s32.totalorder %s598, %s581
                %s600 = scalar_select %p599, 0, %s598
                %s601 = smul.u32 %s600, 4
                %s602 = smul.u32 %s600, 4
                %s603 = scalar_lea.vmem %s584, %s601 [#allocation4]
                %s604 = scalar_lea.vmem %s586, %s602
              $region72: #{tpu_custom_call.1} parent=59 // loop_footer
                %s590 = sadd.s32 %s588, 1
              $region73: #{tpu_custom_call.1} parent=59 // loop_footer_branch
                %587 = sbr.rel target = $region69
              $region74: #{tpu_custom_call.1} parent=59 // loop_exit
                _
            $region60: #{tpu_custom_call.1} parent=51 // pred_fallthru
              _
          $region52: #{tpu_custom_call.1} parent=47 // pred_fallthru
            _
          %654 = vnop
        $region48: #{tpu_custom_call.1} parent=35 // pred_fallthru
          _
        // Predicated region
        $region93: #{tpu_custom_call.1} parent=35 // pred_check
          %p655 = pneg %p178
        $region94: #{tpu_custom_call.1} parent=35 // pred_check_branch
          %657 = sbr.rel (%p655) target = $region96
        $region95: #{tpu_custom_call.1} parent=35 // pred_region
          %s659 = ssub.s32 16, 16
          %660 = vsyncadd %s530, %s659
          %s661 = smul.addr %s28, 16
          %s662 = scalar_lea.hbm %s5, %s661
          %s664 = sshll.u32 %s532, 4
          %s665 = int_to_ptr.vmem [resolvable:$true] %s664
          %667 = dma.vmem_to_hbm [thread:$0]  %s665, 16, %s662, %s530
        $region96: #{tpu_custom_call.1} parent=35 // pred_fallthru
          _
        // Predicated region
        $region97: #{tpu_custom_call.1} parent=35 // pred_check
          %p668 = pneg %p204
        $region98: #{tpu_custom_call.1} parent=35 // pred_check_branch
          %670 = sbr.rel (%p668) target = $region100
        $region99: #{tpu_custom_call.1} parent=35 // pred_region
          %s672 = ssub.s32 128, 128
          %673 = vsyncadd %s534, %s672
          %s674 = smul.addr %s28, 128
          %s675 = scalar_lea.hbm %s6, %s674
          %s677 = sshll.u32 %s537, 4
          %s678 = int_to_ptr.vmem [resolvable:$true] %s677
          %680 = dma.vmem_to_hbm [thread:$0]  %s678, 128, %s675, %s534
        $region100: #{tpu_custom_call.1} parent=35 // pred_fallthru
          _
      $region36: #{tpu_custom_call.1} parent=5 // pred_fallthru
        _
      %p681 = scmp.le.s32.totalorder 2, %s19
      // Predicated region
      $region101: #{tpu_custom_call.1} parent=5 // pred_check
        %p682 = pneg %p681
      $region102: #{tpu_custom_call.1} parent=5 // pred_check_branch
        %684 = sbr.rel (%p682) target = $region104
      $region103: #{tpu_custom_call.1} parent=5 // pred_region
        %s685 = ssub.s32 %s19, 2
        // Predicated region
        $region105: #{tpu_custom_call.1} parent=103 // pred_check
          %p686 = pneg %p158
        $region106: #{tpu_custom_call.1} parent=103 // pred_check_branch
          %688 = sbr.rel (%p686) target = $region108
        $region107: #{tpu_custom_call.1} parent=103 // pred_region
          %s689 = sand.u32 %s143, 1
          %s690 = sand.u32 %s143, 1
          %s691 = smul.addr %s690, 8
          %s692 = scalar_lea.vmem [#allocation4], %s691
        $region108: #{tpu_custom_call.1} parent=103 // pred_fallthru
          _
        // Predicated region
        $region109: #{tpu_custom_call.1} parent=103 // pred_check
          %p693 = pneg %p184
        $region110: #{tpu_custom_call.1} parent=103 // pred_check_branch
          %695 = sbr.rel (%p693) target = $region112
        $region111: #{tpu_custom_call.1} parent=103 // pred_region
          %s696 = sand.u32 %s169, 1
          %s697 = scalar_lea.sflag [#allocation6], %s696
          %s698 = sand.u32 %s169, 1
          %s699 = scalar_lea.vmem [#allocation5], %s698
          %700 = dma.done %s697, 16
        $region112: #{tpu_custom_call.1} parent=103 // pred_fallthru
          _
        // Predicated region
        $region113: #{tpu_custom_call.1} parent=103 // pred_check
          %p701 = pneg %p210
        $region114: #{tpu_custom_call.1} parent=103 // pred_check_branch
          %703 = sbr.rel (%p701) target = $region116
        $region115: #{tpu_custom_call.1} parent=103 // pred_region
          %s704 = sand.u32 %s195, 1
          %s705 = scalar_lea.sflag [#allocation8], %s704
          %s706 = sand.u32 %s195, 1
          %s707 = smul.addr %s706, 8
          %s708 = scalar_lea.vmem [#allocation7], %s707
          %709 = dma.done %s705, 128
        $region116: #{tpu_custom_call.1} parent=103 // pred_fallthru
          _
      $region104: #{tpu_custom_call.1} parent=5 // pred_fallthru
        _
    $region6: #{tpu_custom_call.1} parent=1 // loop_footer
      %s23 = sadd.s32 1, %s19
    $region7: #{tpu_custom_call.1} parent=1 // loop_footer_branch
      %18 = sbr.rel target = $region3
    $region8: #{tpu_custom_call.1} parent=1 // loop_exit
      _
    %710 = vsyncpa [#allocation6], 1
    %s711 = scalar_lea.sflag [#allocation6], 1
    %712 = vsyncpa %s711, 1
    %713 = vsyncpa [#allocation8], 1
    %s714 = scalar_lea.sflag [#allocation8], 1
    %715 = vsyncpa %s714, 1

// kernel: tpu_custom_call.1
$region0: #{tpu_custom_call.1}
  #allocation0 [shape = 'u32[]', space=smem, size = 0x4, offset = 0x4, fixed_abs, tag = 'smem constant byte address 0x4 - core index']
  #allocation1 [shape = 'u32[144,128]{1,0:T(1,128)}', space=vmem, size = 0x12000, scoped, tag = 'internal scratch']
  #allocation2 [shape = 'f32[1,24]{1,0:T(1,128)}', space=vmem, size = 0x200, scoped, tag = 'scratch operand']
  #allocation3 [shape = 'f32[1,24]{1,0:T(1,128)}', space=vmem, size = 0x200, scoped, tag = 'scratch operand']
  %s0 = inlined_call_operand.vmem [shape: f32[2,40,32], index: 0, kind: input, shape index: {}]
  %s1 = inlined_call_operand.vmem [shape: f32[32,24], index: 1, kind: input, shape index: {}]
  %s2 = inlined_call_operand.vmem [shape: f32[1,24], index: 2, kind: input, shape index: {}]
  %s3 = inlined_call_operand.vmem [shape: f32[2,1,24], index: 3, kind: input, shape index: {}]
  %s4 = inlined_call_operand.vmem [shape: bf16[2,40,24], index: 4, kind: output, shape index: {0}]
  %s5 = inlined_call_operand.hbm [shape: f32[2,1,24], index: 5, kind: output, shape index: {1}]
  %s6 = inlined_call_operand.hbm [shape: f32[2,8,128], index: 6, kind: output, shape index: {2}]
  %7 = xla_tuple %s4, %s5, %s6
  %s8 = sld [smem:[#allocation0]]
  $region117: #{tpu_custom_call.1} parent=0
    _
  %s10 = ssub.s32 1, %s8
  %s11 = scalar_select 0, %s10, %s8
  $region1: #{tpu_custom_call.1} parent=0
    #allocation4 [shape = 'u8[8192]{0}', space=vmem, size = 0x2000, scoped, tag = 'output window, operand 0']
    #allocation5 [shape = 'u8[1024]{0}', space=vmem, size = 0x400, scoped, tag = 'output window, operand 1']
    #allocation6 [shape = 's32[2]{0}', space=sflag, size = 0x8, scoped, tag = 'scoped memory for tpu_custom_call.1']
    #allocation7 [shape = 'u8[8192]{0}', space=vmem, size = 0x2000, scoped, tag = 'output window, operand 2']
    #allocation8 [shape = 's32[2]{0}', space=sflag, size = 0x8, scoped, tag = 'scoped memory for tpu_custom_call.1']
    %12 = vsyncpa [#allocation6], 0
    %s13 = scalar_lea.sflag [#allocation6], 1
    %14 = vsyncpa %s13, 0
    %15 = vsyncpa [#allocation8], 0
    %s16 = scalar_lea.sflag [#allocation8], 1
    %17 = vsyncpa %s16, 0
    loop: start=0, step=1, limit=8
    $region2: #{tpu_custom_call.1} parent=1 // loop_pre_header
      _
    $region3: #{tpu_custom_call.1} parent=1 // loop_header
      %s19 = sphi 0, %s23
      %p20 = scmp.ge.s32.totalorder %s19, 8
      %s26 = sphi 0, %s38
      %s27 = sphi 0, %s34
      %s28 = sphi 0, %s26
      %s29 = sphi 0, %s27
      %s30 = sphi 0, %s28
      %s31 = sphi 0, %s29
      %s43 = sphi 0, %s45
      %s46 = sphi 0, %s43
      %s47 = sphi 0, %s46
      %s63 = sphi 0, %s47
      %s67 = sphi 0, %s67
      %s69 = sphi 0, %s67
      %s70 = sphi 0, %s69
      %s84 = sphi 0, %s70
      %s88 = sphi 0, %s88
      %s90 = sphi 0, %s88
      %s91 = sphi 0, %s90
      %s105 = sphi 0, %s91
      %s111 = sphi 0, %s113
      %s114 = sphi 0, %s111
      %s115 = sphi 0, %s114
      %s131 = sphi 0, %s115
      %s139 = sphi 0, %s141
      %s142 = sphi 0, %s139
      %s143 = sphi 0, %s142
      %s159 = sphi 0, %s143
      %s165 = sphi 0, %s167
      %s168 = sphi 0, %s165
      %s169 = sphi 0, %s168
      %s185 = sphi 0, %s169
      %s191 = sphi 0, %s193
      %s194 = sphi 0, %s191
      %s195 = sphi 0, %s194
      %s211 = sphi 0, %s195
    $region4: #{tpu_custom_call.1} parent=1 // loop_header_branch
      %22 = sbr.rel (%p20) target = $region8
    $region5: #{tpu_custom_call.1} parent=1 // loop_body
      %s24 = ssub.s32 %s19, 1
      %s25 = ssub.s32 %s19, 2
      %s32 = sadd.s32 1, %s27
      %p33 = scmp.ge.s32.totalorder %s32, 3
      %s34 = scalar_select %p33, 0, %s32
      %s35 = sadd.s32 1, %s26
      %s36 = scalar_select %p33, %s35, %s26
      %p37 = scmp.ge.s32.totalorder %s36, 2
      %s38 = scalar_select %p37, 0, %s36
      %s39 = ssub.s32 %s26, %s38
      %s40 = ssub.s32 %s27, %s34
      %s41 = sor.u32 %s39, %s40
      %p42 = scmp.eq.s32.totalorder %s41, 0
      %s44 = sadd.s32 %s43, 1
      %s45 = scalar_select %p42, %s43, %s44
      %p48 = pneg %p42
      %p49 = scmp.eq.s32.totalorder %s19, 5
      %p50 = por %p48, %p49
      %p51 = scmp.ne.s32.totalorder %s43, %s46
      %p52 = scmp.eq.s32.totalorder %s19, 0
      %p53 = por %p51, %p52
      %p54 = scmp.ne.s32.totalorder %s43, %s46
      %p55 = scmp.eq.s32.totalorder %s24, 5
      %p56 = por %p54, %p55
      %p57 = scmp.ne.s32.totalorder %s46, %s47
      %p58 = scmp.eq.s32.totalorder %s24, 0
      %p59 = por %p57, %p58
      %p60 = scmp.ne.s32.totalorder %s46, %s47
      %p61 = scmp.eq.s32.totalorder %s25, 5
      %p62 = por %p60, %p61
      %p64 = scmp.ne.s32.totalorder %s47, %s63
      %p65 = scmp.eq.s32.totalorder %s25, 0
      %p66 = por %p64, %p65
      %s68 = sadd.s32 %s67, 1
      %p71 = scmp.eq.s32.totalorder %s19, 5
      %p72 = scmp.ne.s32.totalorder %s67, %s69
      %p73 = scmp.eq.s32.totalorder %s19, 0
      %p74 = por %p72, %p73
      %p75 = scmp.ne.s32.totalorder %s67, %s69
      %p76 = scmp.eq.s32.totalorder %s24, 5
      %p77 = por %p75, %p76
      %p78 = scmp.ne.s32.totalorder %s69, %s70
      %p79 = scmp.eq.s32.totalorder %s24, 0
      %p80 = por %p78, %p79
      %p81 = scmp.ne.s32.totalorder %s69, %s70
      %p82 = scmp.eq.s32.totalorder %s25, 5
      %p83 = por %p81, %p82
      %p85 = scmp.ne.s32.totalorder %s70, %s84
      %p86 = scmp.eq.s32.totalorder %s25, 0
      %p87 = por %p85, %p86
      %s89 = sadd.s32 %s88, 1
      %p92 = scmp.eq.s32.totalorder %s19, 5
      %p93 = scmp.ne.s32.totalorder %s88, %s90
      %p94 = scmp.eq.s32.totalorder %s19, 0
      %p95 = por %p93, %p94
      %p96 = scmp.ne.s32.totalorder %s88, %s90
      %p97 = scmp.eq.s32.totalorder %s24, 5
      %p98 = por %p96, %p97
      %p99 = scmp.ne.s32.totalorder %s90, %s91
      %p100 = scmp.eq.s32.totalorder %s24, 0
      %p101 = por %p99, %p100
      %p102 = scmp.ne.s32.totalorder %s90, %s91
      %p103 = scmp.eq.s32.totalorder %s25, 5
      %p104 = por %p102, %p103
      %p106 = scmp.ne.s32.totalorder %s91, %s105
      %p107 = scmp.eq.s32.totalorder %s25, 0
      %p108 = por %p106, %p107
      %s109 = ssub.s32 %s26, %s38
      %p110 = scmp.eq.s32.totalorder %s109, 0
      %s112 = sadd.s32 %s111, 1
      %s113 = scalar_select %p110, %s111, %s112
      %p116 = pneg %p110
      %p117 = scmp.eq.s32.totalorder %s19, 5
      %p118 = por %p116, %p117
      %p119 = scmp.ne.s32.totalorder %s111, %s114
      %p120 = scmp.eq.s32.totalorder %s19, 0
      %p121 = por %p119, %p120
      %p122 = scmp.ne.s32.totalorder %s111, %s114
      %p123 = scmp.eq.s32.totalorder %s24, 5
      %p124 = por %p122, %p123
      %p125 = scmp.ne.s32.totalorder %s114, %s115
      %p126 = scmp.eq.s32.totalorder %s24, 0
      %p127 = por %p125, %p126
      %p128 = scmp.ne.s32.totalorder %s114, %s115
      %p129 = scmp.eq.s32.totalorder %s25, 5
      %p130 = por %p128, %p129
      %p132 = scmp.ne.s32.totalorder %s115, %s131
      %p133 = scmp.eq.s32.totalorder %s25, 0
      %p134 = por %p132, %p133
      %s135 = ssub.s32 %s26, %s38
      %s136 = ssub.s32 %s27, %s34
      %s137 = sor.u32 %s135, %s136
      %p138 = scmp.eq.s32.totalorder %s137, 0
      %s140 = sadd.s32 %s139, 1
      %s141 = scalar_select %p138, %s139, %s140
      %p144 = pneg %p138
      %p145 = scmp.eq.s32.totalorder %s19, 5
      %p146 = por %p144, %p145
      %p147 = scmp.ne.s32.totalorder %s139, %s142
      %p148 = scmp.eq.s32.totalorder %s19, 0
      %p149 = por %p147, %p148
      %p150 = scmp.ne.s32.totalorder %s139, %s142
      %p151 = scmp.eq.s32.totalorder %s24, 5
      %p152 = por %p150, %p151
      %p153 = scmp.ne.s32.totalorder %s142, %s143
      %p154 = scmp.eq.s32.totalorder %s24, 0
      %p155 = por %p153, %p154
      %p156 = scmp.ne.s32.totalorder %s142, %s143
      %p157 = scmp.eq.s32.totalorder %s25, 5
      %p158 = por %p156, %p157
      %p160 = scmp.ne.s32.totalorder %s143, %s159
      %p161 = scmp.eq.s32.totalorder %s25, 0
      %p162 = por %p160, %p161
      %s163 = ssub.s32 %s26, %s38
      %p164 = scmp.eq.s32.totalorder %s163, 0
      %s166 = sadd.s32 %s165, 1
      %s167 = scalar_select %p164, %s165, %s166
      %p170 = pneg %p164
      %p171 = scmp.eq.s32.totalorder %s19, 5
      %p172 = por %p170, %p171
      %p173 = scmp.ne.s32.totalorder %s165, %s168
      %p174 = scmp.eq.s32.totalorder %s19, 0
      %p175 = por %p173, %p174
      %p176 = scmp.ne.s32.totalorder %s165, %s168
      %p177 = scmp.eq.s32.totalorder %s24, 5
      %p178 = por %p176, %p177
      %p179 = scmp.ne.s32.totalorder %s168, %s169
      %p180 = scmp.eq.s32.totalorder %s24, 0
      %p181 = por %p179, %p180
      %p182 = scmp.ne.s32.totalorder %s168, %s169
      %p183 = scmp.eq.s32.totalorder %s25, 5
      %p184 = por %p182, %p183
      %p186 = scmp.ne.s32.totalorder %s169, %s185
      %p187 = scmp.eq.s32.totalorder %s25, 0
      %p188 = por %p186, %p187
      %s189 = ssub.s32 %s26, %s38
      %p190 = scmp.eq.s32.totalorder %s189, 0
      %s192 = sadd.s32 %s191, 1
      %s193 = scalar_select %p190, %s191, %s192
      %p196 = pneg %p190
      %p197 = scmp.eq.s32.totalorder %s19, 5
      %p198 = por %p196, %p197
      %p199 = scmp.ne.s32.totalorder %s191, %s194
      %p200 = scmp.eq.s32.totalorder %s19, 0
      %p201 = por %p199, %p200
      %p202 = scmp.ne.s32.totalorder %s191, %s194
      %p203 = scmp.eq.s32.totalorder %s24, 5
      %p204 = por %p202, %p203
      %p205 = scmp.ne.s32.totalorder %s194, %s195
      %p206 = scmp.eq.s32.totalorder %s24, 0
      %p207 = por %p205, %p206
      %p208 = scmp.ne.s32.totalorder %s194, %s195
      %p209 = scmp.eq.s32.totalorder %s25, 5
      %p210 = por %p208, %p209
      %p212 = scmp.ne.s32.totalorder %s195, %s211
      %p213 = scmp.eq.s32.totalorder %s25, 0
      %p214 = por %p212, %p213
      %p215 = scmp.le.s32.totalorder 1, %s19
      %p216 = scmp.lt.s32.totalorder %s19, 7
      %p217 = pnand %p215, %p216
      %p218 = pneg %p217
      // Predicated region
      $region9: #{tpu_custom_call.1} parent=5 // pred_check
        _
      $region10: #{tpu_custom_call.1} parent=5 // pred_check_branch
        %220 = sbr.rel (%p217) target = $region12
      $region11: #{tpu_custom_call.1} parent=5 // pred_region
        %s221 = ssub.s32 %s19, 1
        // Predicated region
        $region13: #{tpu_custom_call.1} parent=11 // pred_check
          %p222 = pneg %p80
        $region14: #{tpu_custom_call.1} parent=11 // pred_check_branch
          %224 = sbr.rel (%p222) target = $region16
        $region15: #{tpu_custom_call.1} parent=11 // pred_region
          _
        $region16: #{tpu_custom_call.1} parent=11 // pred_fallthru
          _
        // Predicated region
        $region17: #{tpu_custom_call.1} parent=11 // pred_check
          %p225 = pneg %p101
        $region18: #{tpu_custom_call.1} parent=11 // pred_check_branch
          %227 = sbr.rel (%p225) target = $region20
        $region19: #{tpu_custom_call.1} parent=11 // pred_region
          _
        $region20: #{tpu_custom_call.1} parent=11 // pred_fallthru
          _
      $region12: #{tpu_custom_call.1} parent=5 // pred_fallthru
        _
      %p228 = scmp.lt.s32.totalorder %s19, 6
      // Predicated region
      $region21: #{tpu_custom_call.1} parent=5 // pred_check
        %p229 = pneg %p228
      $region22: #{tpu_custom_call.1} parent=5 // pred_check_branch
        %231 = sbr.rel (%p229) target = $region24
      $region23: #{tpu_custom_call.1} parent=5 // pred_region
        // Predicated region
        $region25: #{tpu_custom_call.1} parent=23 // pred_check
          %p232 = pneg %p53
        $region26: #{tpu_custom_call.1} parent=23 // pred_check_branch
          %234 = sbr.rel (%p232) target = $region28
        $region27: #{tpu_custom_call.1} parent=23 // pred_region
          %s235 = smul.u32 2, %s27
          %s236 = ssub.s32 5, %s235
          %p237 = scmp.lt.s32.totalorder %s236, 2
          %s238 = scalar_select %p237, %s236, 2
          %s239 = smul.u32 128, %s238
          %p240 = scmp.lt.s32.totalorder %s26, 1
          %s241 = scalar_select %p240, %s26, 1
          %p242 = scmp.lt.s32.totalorder %s235, 4
          %s243 = scalar_select %p242, %s235, 4
          %s244 = smul.addr %s241, 5
          %s245 = sadd.s32 %s243, %s244
          %s246 = smul.addr %s245, 8
          %s247 = scalar_lea.vmem %s0, %s246
          %s248 = smul.u32 2, %s27
          %s249 = ssub.s32 5, %s248
          %p250 = scmp.lt.s32.totalorder %s249, 2
          %s251 = scalar_select %p250, %s249, 2
          %s252 = smul.u32 128, %s251
        $region28: #{tpu_custom_call.1} parent=23 // pred_fallthru
          _
        // Predicated region
        $region29: #{tpu_custom_call.1} parent=23 // pred_check
          %p253 = pneg %p121
        $region30: #{tpu_custom_call.1} parent=23 // pred_check_branch
          %255 = sbr.rel (%p253) target = $region32
        $region31: #{tpu_custom_call.1} parent=23 // pred_region
          %p256 = scmp.lt.s32.totalorder %s26, 1
          %s257 = scalar_select %p256, %s26, 1
          %s258 = scalar_lea.vmem %s3, %s257
        $region32: #{tpu_custom_call.1} parent=23 // pred_fallthru
          _
      $region24: #{tpu_custom_call.1} parent=5 // pred_fallthru
        _
      %p259 = scmp.le.s32.totalorder 1, %s19
      %p260 = scmp.lt.s32.totalorder %s19, 7
      %p261 = pnand %p259, %p260
      %p262 = pneg %p261
      // Predicated region
      $region33: #{tpu_custom_call.1} parent=5 // pred_check
        _
      $region34: #{tpu_custom_call.1} parent=5 // pred_check_branch
        %264 = sbr.rel (%p261) target = $region36
      $region35: #{tpu_custom_call.1} parent=5 // pred_region
        %s265 = ssub.s32 %s19, 1
        %s266 = smul.u32 2, %s29
        %s267 = ssub.s32 5, %s266
        %p268 = scmp.lt.s32.totalorder %s267, 2
        %s269 = scalar_select %p268, %s267, 2
        %s270 = smul.u32 128, %s269
        %p271 = scmp.lt.s32.totalorder %s28, 1
        %s272 = scalar_select %p271, %s28, 1
        %p273 = scmp.lt.s32.totalorder %s266, 4
        %s274 = scalar_select %p273, %s266, 4
        %s275 = smul.addr %s272, 5
        %s276 = sadd.s32 %s274, %s275
        %s277 = smul.addr %s276, 8
        %s278 = scalar_lea.vmem %s0, %s277
        %p279 = pneg %p59
        %p280 = pneg %p56
        %p281 = pneg %p80
        %p282 = pneg %p77
        %p283 = pneg %p101
        %p284 = pneg %p98
        %p285 = scmp.lt.s32.totalorder %s28, 1
        %s286 = scalar_select %p285, %s28, 1
        %s287 = scalar_lea.vmem %s3, %s286
        %p288 = pneg %p127
        %p289 = pneg %p124
        %p290 = pneg %p155
        %p291 = pneg %p152
        %s292 = sand.u32 %s142, 1
        %s293 = sand.u32 %s142, 1
        %s294 = smul.addr %s293, 8
        %s295 = scalar_lea.vmem [#allocation4], %s294
        %p296 = pneg %p181
        %p297 = pneg %p178
        %s298 = sand.u32 %s168, 1
        %s299 = scalar_lea.sflag [#allocation6], %s298
        %s300 = sand.u32 %s168, 1
        %s301 = scalar_lea.vmem [#allocation5], %s300
        %p302 = pneg %p207
        %p303 = pneg %p204
        %s304 = sand.u32 %s194, 1
        %s305 = scalar_lea.sflag [#allocation8], %s304
        %s306 = sand.u32 %s194, 1
        %s307 = smul.addr %s306, 8
        %s308 = scalar_lea.vmem [#allocation7], %s307
        %s309 = smul.u32 2, %s29
        %s310 = ssub.s32 5, %s309
        %p311 = scmp.lt.s32.totalorder %s310, 2
        %s312 = scalar_select %p311, %s310, 2
        %s313 = smul.u32 128, %s312
        %p314 = scmp.lt.s32.totalorder %s28, 1
        %s315 = scalar_select %p314, %s28, 1
        %p316 = scmp.lt.s32.totalorder %s309, 4
        %s317 = scalar_select %p316, %s309, 4
        %s318 = smul.addr %s315, 5
        %s319 = sadd.s32 %s317, %s318
        %s320 = smul.addr %s319, 8
        %s321 = scalar_lea.vmem %s0, %s320
        %s322 = smul.u32 2, %s29
        %s323 = ssub.s32 5, %s322
        %p324 = scmp.lt.s32.totalorder %s323, 2
        %s325 = scalar_select %p324, %s323, 2
        %s326 = smul.u32 128, %s325
        %p327 = scmp.lt.s32.totalorder %s28, 1
        %s328 = scalar_select %p327, %s28, 1
        %s329 = scalar_lea.vmem %s3, %s328
        %s330 = smul.u32 2, %s29
        %s331 = ssub.s32 5, %s330
        %p332 = scmp.lt.s32.totalorder %s331, 2
        %s333 = scalar_select %p332, %s331, 2
        %s334 = smul.u32 64, %s333
        %p336 = scmp.eq.s32.totalorder %s29, 0
        // Predicated region
        $region37: #{tpu_custom_call.1} parent=35 // pred_check
          %p337 = pneg %p336
        $region38: #{tpu_custom_call.1} parent=35 // pred_check_branch
          %339 = sbr.rel (%p337) target = $region40
        $region39: #{tpu_custom_call.1} parent=35 // pred_region
          %vm340 = vcmask 188416
          %341 = vst.msk [vmem:[#allocation2] sm:$0x1] %vm340, 0.0
          %342 = vst.msk [vmem:[#allocation3] sm:$0x1] %vm340, -inf
        $region40: #{tpu_custom_call.1} parent=35 // pred_fallthru
          _
        %v343 = vld [vmem:[%s321] sm:$0xff]
        %v344 = vld [vmem:[%s321 + $0x8] sm:$0xff]
        %v345 = vpack.c.bf16 %v344, %v343
        %v346 = vld [vmem:[%s1] sm:$0xff]
        %v347 = vld [vmem:[%s1 + $0x8] sm:$0xff]
        %v348 = vld [vmem:[%s1 + $0x10] sm:$0xff]
        %v349 = vld [vmem:[%s1 + $0x18] sm:$0xff]
        %v350 = vpack.c.bf16 %v347, %v346
        %v351 = vpack.c.bf16 %v349, %v348
        %v352 = vld [vmem:[%s2] sm:$0x1]
        %v354 = vlaneseq
        %v355 = vshrl.u32 %v354, 7
        %v356 = vsub.s32 0, %v355
        %v357 = vrot.slane %v352, %v356
        %vm359 = vcmask 261120
        %v361 = vsel %vm359, %v345, 0
        %363 = vmatprep.subr.bf16.mxu0 0
        %364 = vmatpush1.bf16.msra.mxu0 %v350
        %365 = vmatprep.subr.bf16.mxu0 0
        %366 = vmatpush1.bf16.msra.mxu0 %v351
        %367 = vmatprep.subr.bf16.mxu0 0
        %368 = vmatpush1.bf16.msra.mxu0 0
        %369 = vmatprep.subr.bf16.mxu0 0
        %370 = vmatpush1.bf16.msra.mxu0 0
        %371 = vmatprep.subr.bf16.mxu0 0
        %372 = vmatpush1.bf16.msra.mxu0 0
        %373 = vmatprep.subr.bf16.mxu0 0
        %374 = vmatpush1.bf16.msra.mxu0 0
        %375 = vmatprep.subr.bf16.mxu0 0
        %376 = vmatpush1.bf16.msra.mxu0 0
        %377 = vmatprep.subr.bf16.mxu0 0
        %378 = vmatpush1.bf16.msra.mxu0 0
        %379 = vmatprep.subr.bf16.mxu0 0
        %380 = vmatpush1.bf16.msra.mxu0 0
        %381 = vmatprep.subr.bf16.mxu0 0
        %382 = vmatpush1.bf16.msra.mxu0 0
        %383 = vmatprep.subr.bf16.mxu0 0
        %384 = vmatpush1.bf16.msra.mxu0 0
        %385 = vmatprep.subr.bf16.mxu0 0
        %386 = vmatpush1.bf16.msra.mxu0 0
        %387 = vmatprep.subr.bf16.mxu0 0
        %388 = vmatpush1.bf16.msra.mxu0 0
        %389 = vmatprep.subr.bf16.mxu0 0
        %390 = vmatpush1.bf16.msra.mxu0 0
        %391 = vmatprep.subr.bf16.mxu0 0
        %392 = vmatpush1.bf16.msra.mxu0 0
        %393 = vmatprep.subr.bf16.mxu0 0
        %394 = vmatpush1.bf16.msra.mxu0 0
        %395 = vmatprep.mubr.bf16.mxu0 0
        %396 = vmatmul.mubr.bf16.gmra.mrb[0].mxu0 %v361
        %v397 = vpop.f32.mrb[0].mxu0
        %v398 = vadd.f32 %v357, %v397
        %v399 = vpop.f32.mrb[0].mxu0
        %v400 = vpop.f32.mrb[0].mxu0
        %v401 = vadd.f32 %v357, %v400
        %v402 = vpop.f32.mrb[0].mxu0
        %403 = vdwg.mxu0
        %v404 = vpack.c.bf16 %v401, %v398
        %v406 = vunpack.c.l.b16 %v404
        %v407 = vunpack.c.h.b16 %v404
        %v408 = vpack.c.b16 %v406, %v406
        %v409 = vpack.c.b16 %v407, %v407
        %vm412 = vcmask 191488
        %413 = vst.msk [vmem:[%s295] sm:$0xf] %vm412, %v408
        %414 = vst.msk [vmem:[%s295 + $0x4] sm:$0xf] %vm412, %v409
        %s415 = smul.u32 %s29, 16
        %v416 = vlaneseq
        %v417 = vshrl.u32 %v416, 7
        %v418 = vadd.s32 %v417, 8
        %v419 = vstv %s415
        %v420 = vadd.s32 %v419, %v417
        %v421 = vadd.s32 %v419, %v418
        %vm422 = vcmp.lt.s32.totalorder %v420, 40
        %vm423 = vcmp.lt.s32.totalorder %v421, 40
        %v424 = vsel %vm422, %v398, 0.0
        %v425 = vsel %vm423, %v401, 0.0
        %v426 = vsel %vm422, %v398, -inf
        %v427 = vsel %vm423, %v401, -inf
        %v428 = vld [vmem:[#allocation2] sm:$0x1]
        %vm429 = vcmask 195584
        %v430 = vsel %vm429, %v424, 0.0
        %v431 = vsel %vm429, %v425, 0.0
        %v432 = vadd.f32 %v430, %v431
        %v433 = vrot.slane %v432, 4
        %v434 = vadd.f32 %v432, %v433
        %v435 = vrot.slane %v434, 2
        %v436 = vadd.f32 %v434, %v435
        %v437 = vrot.slane %v436, 1
        %v438 = vadd.f32 %v436, %v437
        %v439 = vadd.f32 %v428, %v438
        %vm440 = vcmask 188416
        %441 = vst.msk [vmem:[#allocation2] sm:$0x1] %vm440, %v439
        %v442 = vld [vmem:[#allocation3] sm:$0x1]
        %v443 = vsel %vm429, %v426, -inf
        %v444 = vsel %vm429, %v427, -inf
        %v445 = vmax.f32 %v443, %v444
        %v446 = vrot.slane %v445, 4
        %v447 = vmax.f32 %v445, %v446
        %v448 = vrot.slane %v447, 2
        %v449 = vmax.f32 %v447, %v448
        %v450 = vrot.slane %v449, 1
        %v451 = vmax.f32 %v449, %v450
        %v452 = vmax.f32 %v442, %v451
        %453 = vst.msk [vmem:[#allocation3] sm:$0x1] %vm440, %v452
        %p454 = scmp.eq.s32.totalorder %s29, 2
        // Predicated region
        $region41: #{tpu_custom_call.1} parent=35 // pred_check
          %p455 = pneg %p454
        $region42: #{tpu_custom_call.1} parent=35 // pred_check_branch
          %457 = sbr.rel (%p455) target = $region44
        $region43: #{tpu_custom_call.1} parent=35 // pred_region
          %v458 = vld [vmem:[#allocation2] sm:$0x1]
          %v459 = vmul.f32 %v458, 0.025
          %v460 = vld [vmem:[#allocation3] sm:$0x1]
          %v461 = vld [vmem:[%s329] sm:$0x1]
          %v462 = vmax.f32 %v459, 0.0
          %v463 = vmul.f32 %v459, %v461
          %v464 = vsub.f32 %v462, %v463
          %v465 = vand.u32 2147483647, %v459
          %v466 = vsub.f32 0.0, %v465
          %v467 = vmul.f32 %v466, 1.442695
          %v468 = vpow.pop %v467
          %v469 = vadd.f32 %v468, 1.0
          %v470 = vlog2.pop %v469
          %v471 = vmul.f32 %v470, 0.6931472
          %v472 = vmul.f32 -0.5, %v468
          %v473 = vadd.f32 %v472, 1.0
          %v474 = vmul.f32 %v473, %v468
          %v475 = vand.u32 2147483647, %v468
          %vm476 = vcmp.lt.f32.partialorder %v475, 0.0004427343
          %v477 = vsel %vm476, %v474, %v471
          %v478 = vadd.f32 %v464, %v477
          %v479 = vsel %vm440, %v478, 0.0
          %480 = vadd.xlane.f32.xlu0 %v479
          %v481 = vpop.xlane.xlu0 %480
          %v482 = vrot.slane %v481, 4
          %v483 = vadd.f32 %v481, %v482
          %v484 = vrot.slane %v483, 2
          %v485 = vadd.f32 %v483, %v484
          %v486 = vrot.slane %v485, 1
          %v487 = vadd.f32 %v485, %v486
          %s488 = vtos %v487
          %s489 = smul.f32 %s488, 0.5
          %v490 = vmax.f32 %v460, 0.0
          %v491 = vmul.f32 %v460, %v461
          %v492 = vsub.f32 %v490, %v491
          %v493 = vand.u32 2147483647, %v460
          %v494 = vsub.f32 0.0, %v493
          %v495 = vmul.f32 %v494, 1.442695
          %v496 = vpow.pop %v495
          %v497 = vadd.f32 %v496, 1.0
          %v498 = vlog2.pop %v497
          %v499 = vmul.f32 %v498, 0.6931472
          %v500 = vmul.f32 -0.5, %v496
          %v501 = vadd.f32 %v500, 1.0
          %v502 = vmul.f32 %v501, %v496
          %v503 = vand.u32 2147483647, %v496
          %vm504 = vcmp.lt.f32.partialorder %v503, 0.0004427343
          %v505 = vsel %vm504, %v502, %v499
          %v506 = vadd.f32 %v492, %v505
          %v507 = vsel %vm440, %v506, 0.0
          %508 = vadd.xlane.f32.xlu0 %v507
          %v509 = vpop.xlane.xlu0 %508
          %v510 = vrot.slane %v509, 4
          %v511 = vadd.f32 %v509, %v510
          %v512 = vrot.slane %v511, 2
          %v513 = vadd.f32 %v511, %v512
          %v514 = vrot.slane %v513, 1
          %v515 = vadd.f32 %v513, %v514
          %s516 = vtos %v515
          %s517 = smul.f32 %s516, 0.5
          %s518 = sadd.f32 %s489, %s517
          %v519 = vrcp.pop 48.0
          %s520 = vtos %v519
          %s521 = smul.f32 %s518, %s520
          %522 = vst.msk [vmem:[%s301] sm:$0x1] %vm440, %v459
          %v523 = vstv %s521
          %524 = vst [vmem:[%s308] sm:$0xff] %v523
        $region44: #{tpu_custom_call.1} parent=35 // pred_fallthru
          _
        %s525 = sand.u32 %s142, 1
        %s526 = sand.u32 %s142, 1
        %s527 = smul.addr %s526, 8
        %s528 = scalar_lea.vmem [#allocation4], %s527
        %s529 = sand.u32 %s168, 1
        %s530 = scalar_lea.sflag [#allocation6], %s529
        %s531 = sand.u32 %s168, 1
        %s532 = scalar_lea.vmem [#allocation5], %s531
        %s533 = sand.u32 %s194, 1
        %s534 = scalar_lea.sflag [#allocation8], %s533
        %s535 = sand.u32 %s194, 1
        %s536 = smul.addr %s535, 8
        %s537 = scalar_lea.vmem [#allocation7], %s536
        // Predicated region
        $region45: #{tpu_custom_call.1} parent=35 // pred_check
          %p538 = pneg %p152
        $region46: #{tpu_custom_call.1} parent=35 // pred_check_branch
          %540 = sbr.rel (%p538) target = $region48
        $region47: #{tpu_custom_call.1} parent=35 // pred_region
          %s541 = smul.u32 2, %s29
          %s542 = ssub.s32 5, %s541
          %p543 = scmp.lt.s32.totalorder %s542, 2
          %s544 = scalar_select %p543, %s542, 2
          %s545 = smul.u32 64, %s544
          %p546 = scmp.ne.s32.totalorder 0, %s545
          %s547 = smul.addr %s28, 5
          %s548 = sadd.s32 %s541, %s547
          %s549 = smul.addr %s548, 4
          %s550 = scalar_lea.vmem %s4, %s549
          // Predicated region
          $region49: #{tpu_custom_call.1} parent=47 // pred_check
            %p551 = pneg %p546
          $region50: #{tpu_custom_call.1} parent=47 // pred_check_branch
            %553 = sbr.rel (%p551) target = $region52
          $region51: #{tpu_custom_call.1} parent=47 // pred_region
            // Predicated region
            $region53: #{tpu_custom_call.1} parent=51 // pred_check
              _
            $region54: #{tpu_custom_call.1} parent=51 // pred_check_branch
              %555 = sbr.rel target = $region56
            $region55: #{tpu_custom_call.1} parent=51 // pred_region
              // Predicated region
              $region75: #{tpu_custom_call.1} parent=55 // pred_check
                _
              $region76: #{tpu_custom_call.1} parent=55 // pred_check_branch
                %606 = sbr.rel (0) target = $region78
              $region77: #{tpu_custom_call.1} parent=55 // pred_region
                %s608 = sshrl.u32 %s544, 1
                // While loop
                $region79: #{tpu_custom_call.1} parent=77 // loop_pre_header
                  _
                $region80: #{tpu_custom_call.1} parent=77 // loop_header
                  %s610 = sphi 0, %s612
                  %p611 = scmp.ge.s32.totalorder %s610, %s608
                  %s615 = sphi 0, %s624
                  %s616 = sphi %s528, %s627
                  %s617 = sphi %s550, %s628
                $region81: #{tpu_custom_call.1} parent=77 // loop_header_branch
                  %614 = sbr.rel (%p611) target = $region85
                $region82: #{tpu_custom_call.1} parent=77 // loop_body
                  %v618 = vld [vmem:[%s616] sm:$0xf]
                  %619 = vst [vmem:[%s617] sm:$0xf] %v618
                  %v620 = vld [vmem:[%s616 + $0x4] sm:$0xf]
                  %621 = vst [vmem:[%s617 + $0x4] sm:$0xf] %v620
                  %s622 = sadd.s32 1, %s615
                  %p623 = scmp.ge.s32.totalorder %s622, %s608
                  %s624 = scalar_select %p623, 0, %s622
                  %s625 = smul.u32 %s624, 8
                  %s626 = smul.u32 %s624, 8
                  %s627 = scalar_lea.vmem %s528, %s625 [#allocation4]
                  %s628 = scalar_lea.vmem %s550, %s626
                $region83: #{tpu_custom_call.1} parent=77 // loop_footer
                  %s612 = sadd.s32 %s610, 1
                $region84: #{tpu_custom_call.1} parent=77 // loop_footer_branch
                  %609 = sbr.rel target = $region80
                $region85: #{tpu_custom_call.1} parent=77 // loop_exit
                  _
                %s629 = sshrl.u32 %s544, 1
                %s630 = sand.u32 %s544, 1
                %s631 = smul.u32 %s629, 2
                %s632 = smul.u32 4, %s631
                %s633 = scalar_lea.vmem %s528, %s632 [#allocation4]
                %s634 = smul.u32 4, %s631
                %s635 = scalar_lea.vmem %s550, %s634
                // While loop
                $region86: #{tpu_custom_call.1} parent=77 // loop_pre_header
                  _
                $region87: #{tpu_custom_call.1} parent=77 // loop_header
                  %s637 = sphi 0, %s639
                  %p638 = scmp.ge.s32.totalorder %s637, %s630
                  %s642 = sphi 0, %s649
                  %s643 = sphi %s633, %s652
                  %s644 = sphi %s635, %s653
                $region88: #{tpu_custom_call.1} parent=77 // loop_header_branch
                  %641 = sbr.rel (%p638) target = $region92
                $region89: #{tpu_custom_call.1} parent=77 // loop_body
                  %v645 = vld [vmem:[%s643] sm:$0xf]
                  %646 = vst [vmem:[%s644] sm:$0xf] %v645
                  %s647 = sadd.s32 1, %s642
                  %p648 = scmp.ge.s32.totalorder %s647, %s630
                  %s649 = scalar_select %p648, 0, %s647
                  %s650 = smul.u32 %s649, 4
                  %s651 = smul.u32 %s649, 4
                  %s652 = scalar_lea.vmem %s633, %s650 [#allocation4]
                  %s653 = scalar_lea.vmem %s635, %s651
                $region90: #{tpu_custom_call.1} parent=77 // loop_footer
                  %s639 = sadd.s32 %s637, 1
                $region91: #{tpu_custom_call.1} parent=77 // loop_footer_branch
                  %636 = sbr.rel target = $region87
                $region92: #{tpu_custom_call.1} parent=77 // loop_exit
                  _
              $region78: #{tpu_custom_call.1} parent=55 // pred_fallthru
                _
            $region56: #{tpu_custom_call.1} parent=51 // pred_fallthru
              _
            // Predicated region
            $region57: #{tpu_custom_call.1} parent=51 // pred_check
              _
            $region58: #{tpu_custom_call.1} parent=51 // pred_check_branch
              %557 = sbr.rel (0) target = $region60
            $region59: #{tpu_custom_call.1} parent=51 // pred_region
              %s559 = sshrl.u32 %s544, 1
              // While loop
              $region61: #{tpu_custom_call.1} parent=59 // loop_pre_header
                _
              $region62: #{tpu_custom_call.1} parent=59 // loop_header
                %s561 = sphi 0, %s563
                %p562 = scmp.ge.s32.totalorder %s561, %s559
                %s566 = sphi 0, %s575
                %s567 = sphi %s528, %s578
                %s568 = sphi %s550, %s579
              $region63: #{tpu_custom_call.1} parent=59 // loop_header_branch
                %565 = sbr.rel (%p562) target = $region67
              $region64: #{tpu_custom_call.1} parent=59 // loop_body
                %v569 = vld [vmem:[%s567] sm:$0xf]
                %570 = vst [vmem:[%s568] sm:$0xf] %v569
                %v571 = vld [vmem:[%s567 + $0x4] sm:$0xf]
                %572 = vst [vmem:[%s568 + $0x4] sm:$0xf] %v571
                %s573 = sadd.s32 1, %s566
                %p574 = scmp.ge.s32.totalorder %s573, %s559
                %s575 = scalar_select %p574, 0, %s573
                %s576 = smul.u32 %s575, 8
                %s577 = smul.u32 %s575, 8
                %s578 = scalar_lea.vmem %s528, %s576 [#allocation4]
                %s579 = scalar_lea.vmem %s550, %s577
              $region65: #{tpu_custom_call.1} parent=59 // loop_footer
                %s563 = sadd.s32 %s561, 1
              $region66: #{tpu_custom_call.1} parent=59 // loop_footer_branch
                %560 = sbr.rel target = $region62
              $region67: #{tpu_custom_call.1} parent=59 // loop_exit
                _
              %s580 = sshrl.u32 %s544, 1
              %s581 = sand.u32 %s544, 1
              %s582 = smul.u32 %s580, 2
              %s583 = smul.u32 4, %s582
              %s584 = scalar_lea.vmem %s528, %s583 [#allocation4]
              %s585 = smul.u32 4, %s582
              %s586 = scalar_lea.vmem %s550, %s585
              // While loop
              $region68: #{tpu_custom_call.1} parent=59 // loop_pre_header
                _
              $region69: #{tpu_custom_call.1} parent=59 // loop_header
                %s588 = sphi 0, %s590
                %p589 = scmp.ge.s32.totalorder %s588, %s581
                %s593 = sphi 0, %s600
                %s594 = sphi %s584, %s603
                %s595 = sphi %s586, %s604
              $region70: #{tpu_custom_call.1} parent=59 // loop_header_branch
                %592 = sbr.rel (%p589) target = $region74
              $region71: #{tpu_custom_call.1} parent=59 // loop_body
                %v596 = vld [vmem:[%s594] sm:$0xf]
                %597 = vst [vmem:[%s595] sm:$0xf] %v596
                %s598 = sadd.s32 1, %s593
                %p599 = scmp.ge.s32.totalorder %s598, %s581
                %s600 = scalar_select %p599, 0, %s598
                %s601 = smul.u32 %s600, 4
                %s602 = smul.u32 %s600, 4
                %s603 = scalar_lea.vmem %s584, %s601 [#allocation4]
                %s604 = scalar_lea.vmem %s586, %s602
              $region72: #{tpu_custom_call.1} parent=59 // loop_footer
                %s590 = sadd.s32 %s588, 1
              $region73: #{tpu_custom_call.1} parent=59 // loop_footer_branch
                %587 = sbr.rel target = $region69
              $region74: #{tpu_custom_call.1} parent=59 // loop_exit
                _
            $region60: #{tpu_custom_call.1} parent=51 // pred_fallthru
              _
          $region52: #{tpu_custom_call.1} parent=47 // pred_fallthru
            _
          %654 = vnop
        $region48: #{tpu_custom_call.1} parent=35 // pred_fallthru
          _
        // Predicated region
        $region93: #{tpu_custom_call.1} parent=35 // pred_check
          %p655 = pneg %p178
        $region94: #{tpu_custom_call.1} parent=35 // pred_check_branch
          %657 = sbr.rel (%p655) target = $region96
        $region95: #{tpu_custom_call.1} parent=35 // pred_region
          %s659 = ssub.s32 16, 16
          %660 = vsyncadd %s530, %s659
          %s661 = smul.addr %s28, 16
          %s662 = scalar_lea.hbm %s5, %s661
          %s664 = sshll.u32 %s532, 4
          %s665 = int_to_ptr.vmem [resolvable:$true] %s664
          %667 = dma.vmem_to_hbm [thread:$0]  %s665, 16, %s662, %s530
        $region96: #{tpu_custom_call.1} parent=35 // pred_fallthru
          _
        // Predicated region
        $region97: #{tpu_custom_call.1} parent=35 // pred_check
          %p668 = pneg %p204
        $region98: #{tpu_custom_call.1} parent=35 // pred_check_branch
          %670 = sbr.rel (%p668) target = $region100
        $region99: #{tpu_custom_call.1} parent=35 // pred_region
          %s672 = ssub.s32 128, 128
          %673 = vsyncadd %s534, %s672
          %s674 = smul.addr %s28, 128
          %s675 = scalar_lea.hbm %s6, %s674
          %s677 = sshll.u32 %s537, 4
          %s678 = int_to_ptr.vmem [resolvable:$true] %s677
          %680 = dma.vmem_to_hbm [thread:$0]  %s678, 128, %s675, %s534
        $region100: #{tpu_custom_call.1} parent=35 // pred_fallthru
          _
      $region36: #{tpu_custom_call.1} parent=5 // pred_fallthru
        _
      %p681 = scmp.le.s32.totalorder 2, %s19
      // Predicated region
      $region101: #{tpu_custom_call.1} parent=5 // pred_check
        %p682 = pneg %p681
      $region102: #{tpu_custom_call.1} parent=5 // pred_check_branch
        %684 = sbr.rel (%p682) target = $region104
      $region103: #{tpu_custom_call.1} parent=5 // pred_region
        %s685 = ssub.s32 %s19, 2
        // Predicated region
        $region105: #{tpu_custom_call.1} parent=103 // pred_check
          %p686 = pneg %p158
        $region106: #{tpu_custom_call.1} parent=103 // pred_check_branch
          %688 = sbr.rel (%p686) target = $region108
        $region107: #{tpu_custom_call.1} parent=103 // pred_region
          %s689 = sand.u32 %s143, 1
          %s690 = sand.u32 %s143, 1
          %s691 = smul.addr %s690, 8
          %s692 = scalar_lea.vmem [#allocation4], %s691
        $region108: #{tpu_custom_call.1} parent=103 // pred_fallthru
          _
        // Predicated region
        $region109: #{tpu_custom_call.1} parent=103 // pred_check
          %p693 = pneg %p184
        $region110: #{tpu_custom_call.1} parent=103 // pred_check_branch
          %695 = sbr.rel (%p693) target = $region112
        $region111: #{tpu_custom_call.1} parent=103 // pred_region
          %s696 = sand.u32 %s169, 1
          %s697 = scalar_lea.sflag [#allocation6], %s696
          %s698 = sand.u32 %s169, 1
          %s699 = scalar_lea.vmem [#allocation5], %s698
          %700 = dma.done %s697, 16
        $region112: #{tpu_custom_call.1} parent=103 // pred_fallthru
          _
        // Predicated region
        $region113: #{tpu_custom_call.1} parent=103 // pred_check
          %p701 = pneg %p210
        $region114: #{tpu_custom_call.1} parent=103 // pred_check_branch
          %703 = sbr.rel (%p701) target = $region116
        $region115: #{tpu_custom_call.1} parent=103 // pred_region
          %s704 = sand.u32 %s195, 1
          %s705 = scalar_lea.sflag [#allocation8], %s704
          %s706 = sand.u32 %s195, 1
          %s707 = smul.addr %s706, 8
          %s708 = scalar_lea.vmem [#allocation7], %s707
          %709 = dma.done %s705, 128
        $region116: #{tpu_custom_call.1} parent=103 // pred_fallthru
          _
      $region104: #{tpu_custom_call.1} parent=5 // pred_fallthru
        _
    $region6: #{tpu_custom_call.1} parent=1 // loop_footer
      %s23 = sadd.s32 1, %s19
    $region7: #{tpu_custom_call.1} parent=1 // loop_footer_branch
      %18 = sbr.rel target = $region3
    $region8: #{tpu_custom_call.1} parent=1 // loop_exit
      _
    %710 = vsyncpa [#allocation6], 1
    %s711 = scalar_lea.sflag [#allocation6], 1
    %712 = vsyncpa %s711, 1
    %713 = vsyncpa [#allocation8], 1
    %s714 = scalar_lea.sflag [#allocation8], 1
    %715 = vsyncpa %s714, 1

</llo_original>
